<compile_context>
chip_gen: v7x
topology: tpu7x:2x2x1
jax: 0.10.0
libtpu: 0.0.40
codegen_flags: <defaults>
</compile_context>

<pallas_src>
import functools

import jax
import jax.numpy as jnp
from jax.experimental import pallas as pl
from jax.experimental.pallas import tpu as pltpu


def _round_up(x, m):
    return ((x + m - 1) // m) * m


def _vmem_limit():
    try:
        cap = int(pltpu.get_tpu_info().vmem_capacity_bytes)
    except Exception:
        cap = 64 * 1024 * 1024
    return min(max(cap - 16 * 1024 * 1024, 32 * 1024 * 1024), 112 * 1024 * 1024)


_VMEM_LIMIT = _vmem_limit()

# Tile candidates (all multiples of 16) for the matmul M axis.
_TM_CANDIDATES = (512, 448, 384, 320, 288, 256, 224, 192, 176, 160, 144,
                  128, 112, 96, 80, 64, 48, 32, 16)


def _pick_tile(m, cap=512):
    """Largest multiple-of-16 tile <= cap that divides m exactly (None if none)."""
    for t in _TM_CANDIDATES:
        if t <= cap and m % t == 0:
            return t
    return None


# ---------------------------------------------------------------------------
# Pallas kernels
# ---------------------------------------------------------------------------

def _make_mm_kernel(act, has_scale, has_res):
    """Tiled matmul: acc over K grid axis, fused SE-scale / bias / act / residual."""

    def kernel(*refs):
        a_ref, w_ref, b_ref = refs[0], refs[1], refs[2]
        pos = 3
        s_ref = None
        r_ref = None
        if has_scale:
            s_ref = refs[pos]; pos += 1
        if has_res:
            r_ref = refs[pos]; pos += 1
        o_ref, acc_ref = refs[pos], refs[pos + 1]

        @pl.when(pl.program_id(2) == 0)
        def _():
            acc_ref[...] = jnp.zeros_like(acc_ref)

        a = a_ref[...]
        if has_scale:
            a = a * s_ref[0]                      # (tm, tk) * (1, tk) per-channel scale
        acc_ref[...] += jnp.dot(a, w_ref[...], preferred_element_type=jnp.float32)

        @pl.when(pl.program_id(2) == pl.num_programs(2) - 1)
        def _():
            out = acc_ref[...] + b_ref[...]
            if act == "silu":
                out = out * jax.nn.sigmoid(out)
            if has_res:
                out = out + r_ref[...].astype(jnp.float32)
            o_ref[...] = out.astype(o_ref.dtype)

    return kernel


def _dw_s1_kernel(x_ref, w_ref, b_ref, o_ref, pool_ref, *, k, row_chunk):
    """Stride-1 depthwise conv + SiLU + per-(batch,channel) pooled-sum epilogue.

    Accumulates in row chunks so the f32 accumulator stays register-resident.
    (pltpu.roll for the dw-offset shifts was considered; plain slices kept for
    robustness - the kernel is DMA/VPU bound either way.)
    """
    Ho, Wo, tc = o_ref.shape[1], o_ref.shape[2], o_ref.shape[3]
    bias = b_ref[0, :]
    total = jnp.zeros((tc,), jnp.float32)
    r0 = 0
    while r0 < Ho:
        ch = min(row_chunk, Ho - r0)
        acc = jnp.zeros((ch, Wo, tc), jnp.float32)
        for dh in range(k):
            rows = x_ref[0, r0 + dh:r0 + dh + ch, :, :].astype(jnp.float32)  # (ch,Wp,tc)
            for dw in range(k):
                acc = acc + rows[:, dw:dw + Wo, :] * w_ref[dh * k + dw, :].astype(jnp.float32)
        acc = acc + bias
        act = acc * jax.nn.sigmoid(acc)
        o_ref[0, r0:r0 + ch, :, :] = act.astype(o_ref.dtype)
        total = total + jnp.sum(jnp.sum(act, axis=0), axis=0)
        r0 += ch
    pool_ref[0, 0, :] = total


def _dw_patch_kernel(p_ref, w_ref, b_ref, o_ref):
    """Strided depthwise conv on pre-gathered taps (only 2 such convs in the net)."""
    kk = p_ref.shape[1]
    acc = jnp.zeros(o_ref.shape, jnp.float32)
    for t in range(kk):
        acc = acc + p_ref[:, t, :].astype(jnp.float32) * w_ref[t, :].astype(jnp.float32)
    acc = acc + b_ref[0, :]
    o_ref[...] = (acc * jax.nn.sigmoid(acc)).astype(o_ref.dtype)


def _se_fc_kernel(p_ref, w1_ref, b1_ref, w2_ref, b2_ref, o_ref, *, inv_hw):
    """Batched SE FCs: scale = sigmoid(fc2(SiLU(fc1(pooled_mean)))) for all N at once."""
    pooled = p_ref[...] * inv_hw                              # (N, C) f32
    h = jnp.dot(pooled.astype(jnp.bfloat16), w1_ref[...],
                preferred_element_type=jnp.float32) + b1_ref[...]
    h = h * jax.nn.sigmoid(h)
    s = jnp.dot(h.astype(jnp.bfloat16), w2_ref[...],
                preferred_element_type=jnp.float32) + b2_ref[...]
    o_ref[...] = jax.nn.sigmoid(s).astype(o_ref.dtype)        # (N, C)


def _gap_fc_kernel(x_ref, w_ref, b_ref, o_ref):
    """Global average pool + (classifier fc o binary fc) for one image."""
    x = x_ref[0].astype(jnp.float32)                          # (H, W, C)
    hw = x.shape[0] * x.shape[1]
    pooled = jnp.sum(jnp.sum(x, axis=0), axis=0, keepdims=True) * (1.0 / hw)   # (1, C)
    out = jnp.dot(pooled.astype(jnp.bfloat16), w_ref[...],
                  preferred_element_type=jnp.float32) + b_ref[...]
    o_ref[0] = out


# ---------------------------------------------------------------------------
# Pallas wrappers (jitted so identical shapes compile once)
# ---------------------------------------------------------------------------

@functools.partial(jax.jit, static_argnames=("act", "hw"))
def matmul_bias_act(a, w, bias, residual=None, scale=None, *, act="none", hw=None):
    """out = act(a [* scale] @ w + bias) [+ residual].

    a:(M,K), w:(K,Np) bf16, bias:(Np,) f32.  `scale`:(N,1,K) bf16 is an optional
    per-(batch,channel) multiplier on `a` (SE fusion); requires hw = H*W per image
    with the chosen tm dividing hw so one tile never spans two images.
    """
    M, K = a.shape
    Kw, Np = w.shape
    assert K == Kw, f"matmul K mismatch: activation {K} vs weight {Kw}"
    a = a.astype(jnp.bfloat16)
    Mp = _round_up(M, 16)

    if scale is not None:
        tm = _pick_tile(hw)
        assert tm is not None, f"SE-fused matmul needs a multiple-of-16 divisor of hw={hw}"
    else:
        tm = _pick_tile(Mp)
    tn = 512 if Np % 512 == 0 else (256 if Np % 256 == 0 else 128)
    # Keep >= 2 blocks along a parallel axis (dual-TensorCore chips).
    if (Mp // tm) * (Np // tn) < 2:
        if Np >= 256:
            tn = 128
        elif tm % 32 == 0:
            tm //= 2
    if K <= 640:
        tk = K                                   # single K step, full-dim block
    else:
        tk = next(t for t in (512, 384, 256, 128) if K % t == 0)

    if Mp != M:
        a = jnp.pad(a, ((0, Mp - M), (0, 0)))
    bias2d = bias.reshape(1, Np).astype(jnp.float32)

    in_specs = [
        pl.BlockSpec((tm, tk), lambda i, j, kk: (i, kk)),
        pl.BlockSpec((tk, tn), lambda i, j, kk: (kk, j)),
        pl.BlockSpec((1, tn), lambda i, j, kk: (0, j)),
    ]
    operands = [a, w.astype(jnp.bfloat16), bias2d]
    if scale is not None:
        rows_per_img = hw // tm                  # M-tiles per image (tm | hw)
        in_specs.append(
            pl.BlockSpec((1, 1, tk), lambda i, j, kk: (i // rows_per_img, 0, kk)))
        operands.append(scale.astype(jnp.bfloat16))
    if residual is not None:
        r = residual.astype(jnp.bfloat16)
        if Mp != M:
            r = jnp.pad(r, ((0, Mp - M), (0, 0)))
        in_specs.append(pl.BlockSpec((tm, tn), lambda i, j, kk: (i, j)))
        operands.append(r)

    out = pl.pallas_call(
        _make_mm_kernel(act, scale is not None, residual is not None),
        out_shape=jax.ShapeDtypeStruct((Mp, Np), jnp.bfloat16),
        grid=(Mp // tm, Np // tn, K // tk),
        in_specs=in_specs,
        out_specs=pl.BlockSpec((tm, tn), lambda i, j, kk: (i, j)),
        scratch_shapes=[pltpu.VMEM((tm, tn), jnp.float32)],
        compiler_params=pltpu.CompilerParams(
            dimension_semantics=("parallel", "parallel", "arbitrary"),
            vmem_limit_bytes=_VMEM_LIMIT),
    )(*operands)
    return out[:M] if Mp != M else out


@functools.partial(jax.jit, static_argnames=("k", "stride", "act", "cin"))
def conv2d_bn_act(x, w, bias, residual=None, *, k, stride, act, cin=None):
    """Dense conv with folded BN; optional fused residual.  x:(N,H,W,Cp) bf16."""
    N, H, W, C = x.shape
    Co = w.shape[1]
    if k == 1:
        a = x.reshape(N * H * W, C)
        r = residual.reshape(N * H * W, Co) if residual is not None else None
        out = matmul_bias_act(a, w, bias, r, act=act)
        return out.reshape(N, H, W, Co)
    # k x k conv via im2col over the REAL input channels only (K = k*k*cin, no 128-pad).
    xr = x[..., :cin] if (cin is not None and cin != C) else x
    cr = xr.shape[-1]
    pad = (k - 1) // 2
    xp = jnp.pad(xr, ((0, 0), (pad, pad), (pad, pad), (0, 0)))
    Ho = (H + 2 * pad - k) // stride + 1
    Wo = (W + 2 * pad - k) // stride + 1
    taps = [xp[:, dh:dh + stride * Ho:stride, dw:dw + stride * Wo:stride, :]
            for dh in range(k) for dw in range(k)]
    a = jnp.concatenate(taps, axis=-1).reshape(N * Ho * Wo, k * k * cr)
    r = residual.reshape(N * Ho * Wo, Co) if residual is not None else None
    out = matmul_bias_act(a, w, bias, r, act=act)
    return out.reshape(N, Ho, Wo, Co)


@functools.partial(jax.jit, static_argnames=("k",))
def depthwise_conv_bn_silu_s1(x, w, bias, *, k):
    """Stride-1 depthwise conv (BN folded) + SiLU; also returns per-(N,C) pooled sums."""
    N, H, W, C = x.shape
    pad = (k - 1) // 2
    Ho, Wo = H, W
    Hp, Wp = H + 2 * pad, W + 2 * pad
    xp = jnp.pad(x, ((0, 0), (pad, pad), (pad, pad), (0, 0))).astype(jnp.bfloat16)
    bias2d = bias.reshape(1, C).astype(jnp.float32)
    tc = 128
    out, pooled = pl.pallas_call(
        functools.partial(_dw_s1_kernel, k=k, row_chunk=8),
        out_shape=(jax.ShapeDtypeStruct((N, Ho, Wo, C), jnp.bfloat16),
                   jax.ShapeDtypeStruct((N, 1, C), jnp.float32)),
        grid=(N, C // tc),
        in_specs=[
            pl.BlockSpec((1, Hp, Wp, tc), lambda n, c: (n, 0, 0, c)),
            pl.BlockSpec((k * k, tc), lambda n, c: (0, c)),
            pl.BlockSpec((1, tc), lambda n, c: (0, c)),
        ],
        out_specs=(pl.BlockSpec((1, Ho, Wo, tc), lambda n, c: (n, 0, 0, c)),
                   pl.BlockSpec((1, 1, tc), lambda n, c: (n, 0, c))),
        compiler_params=pltpu.CompilerParams(
            dimension_semantics=("parallel", "parallel"),
            vmem_limit_bytes=_VMEM_LIMIT),
    )(xp, w, bias2d)
    return out, pooled.reshape(N, C)


@functools.partial(jax.jit, static_argnames=("k", "stride"))
def depthwise_conv_bn_silu_strided(x, w, bias, *, k, stride):
    """Strided depthwise conv (only 2 in the net, low resolution)."""
    N, H, W, C = x.shape
    pad = (k - 1) // 2
    Ho = (H + 2 * pad - k) // stride + 1
    Wo = (W + 2 * pad - k) // stride + 1
    xp = jnp.pad(x, ((0, 0), (pad, pad), (pad, pad), (0, 0))).astype(jnp.bfloat16)
    taps = [xp[:, dh:dh + stride * Ho:stride, dw:dw + stride * Wo:stride, :]
            for dh in range(k) for dw in range(k)]
    p = jnp.stack(taps, axis=3).reshape(N * Ho * Wo, k * k, C)
    M = N * Ho * Wo
    Mp = _round_up(M, 16)
    tm = _pick_tile(Mp, cap=256)
    if Mp != M:
        p = jnp.pad(p, ((0, Mp - M), (0, 0), (0, 0)))
    bias2d = bias.reshape(1, C).astype(jnp.float32)
    tc = 128
    out = pl.pallas_call(
        _dw_patch_kernel,
        out_shape=jax.ShapeDtypeStruct((Mp, C), jnp.bfloat16),
        grid=(Mp // tm, C // tc),
        in_specs=[
            pl.BlockSpec((tm, k * k, tc), lambda i, c: (i, 0, c)),
            pl.BlockSpec((k * k, tc), lambda i, c: (0, c)),
            pl.BlockSpec((1, tc), lambda i, c: (0, c)),
        ],
        out_specs=pl.BlockSpec((tm, tc), lambda i, c: (i, c)),
        compiler_params=pltpu.CompilerParams(
            dimension_semantics=("parallel", "parallel"),
            vmem_limit_bytes=_VMEM_LIMIT),
    )(p, w, bias2d)
    out = out[:M] if Mp != M else out
    return out.reshape(N, Ho, Wo, C)


@functools.partial(jax.jit, static_argnames=("hw",))
def se_scale_vec(pooled_sums, w1, b1, w2, b2, *, hw):
    """SE FCs on the pooled sums for the whole batch -> (N, Cexp) sigmoid scale."""
    N, Cp = pooled_sums.shape
    Sqp = w1.shape[1]
    return pl.pallas_call(
        functools.partial(_se_fc_kernel, inv_hw=1.0 / hw),
        out_shape=jax.ShapeDtypeStruct((N, Cp), jnp.bfloat16),
        grid=(1,),
        in_specs=[
            pl.BlockSpec((N, Cp), lambda i: (0, 0)),
            pl.BlockSpec((Cp, Sqp), lambda i: (0, 0)),
            pl.BlockSpec((1, Sqp), lambda i: (0, 0)),
            pl.BlockSpec((Sqp, Cp), lambda i: (0, 0)),
            pl.BlockSpec((1, Cp), lambda i: (0, 0)),
        ],
        out_specs=pl.BlockSpec((N, Cp), lambda i: (0, 0)),
        compiler_params=pltpu.CompilerParams(
            dimension_semantics=("arbitrary",),
            vmem_limit_bytes=_VMEM_LIMIT),
    )(pooled_sums.astype(jnp.float32), w1, b1, w2, b2)


@jax.jit
def gap_classifier(x, w, b):
    """AdaptiveAvgPool2d(1) + flatten + Linear(1280,1000) + Linear(1000,1) (pre-folded).

    Gridded over batch so dual-TensorCore chips get >=2 parallel blocks.
    """
    N, H, W, C = x.shape
    Np = w.shape[1]
    out = pl.pallas_call(
        _gap_fc_kernel,
        out_shape=jax.ShapeDtypeStruct((N, 1, Np), jnp.float32),
        grid=(N,),
        in_specs=[
            pl.BlockSpec((1, H, W, C), lambda n: (n, 0, 0, 0)),
            pl.BlockSpec((C, Np), lambda n: (0, 0)),
            pl.BlockSpec((1, Np), lambda n: (0, 0)),
        ],
        out_specs=pl.BlockSpec((1, 1, Np), lambda n: (n, 0, 0)),
        compiler_params=pltpu.CompilerParams(
            dimension_semantics=("parallel",),
            vmem_limit_bytes=_VMEM_LIMIT),
    )(x.astype(jnp.bfloat16), w, b)
    return out[:, 0, :1]


# ---------------------------------------------------------------------------
# Parameter construction (synthetic, deterministic; BN folded; channels padded)
# ---------------------------------------------------------------------------

class KeyGen:
    def __init__(self, seed):
        self.key = jax.random.PRNGKey(seed)

    def __call__(self):
        self.key, sub = jax.random.split(self.key)
        return sub


def _bn_params(kg, c):
    gamma = 1.0 + 0.1 * jax.random.normal(kg(), (c,), jnp.float32)
    beta = 0.1 * jax.random.normal(kg(), (c,), jnp.float32)
    mean = 0.1 * jax.random.normal(kg(), (c,), jnp.float32)
    var = 1.0 + 0.1 * jnp.abs(jax.random.normal(kg(), (c,), jnp.float32))
    return gamma, beta, mean, var


def init_conv_bn(kg, cin, cout, k, eps=1e-3):
    cout_pad = _round_up(cout, 128)
    w = jax.random.normal(kg(), (cout, cin, k, k), jnp.float32) * (1.0 / (cin * k * k)) ** 0.5
    gamma, beta, mean, var = _bn_params(kg, cout)
    scale = gamma / jnp.sqrt(var + eps)
    w = w * scale[:, None, None, None]
    b = beta - mean * scale
    w = jnp.transpose(w, (2, 3, 1, 0))                                # (kh, kw, cin, cout)
    if k == 1:
        cin_pad = _round_up(cin, 128)
        w = jnp.pad(w, ((0, 0), (0, 0), (0, cin_pad - cin), (0, cout_pad - cout)))
        w = w.reshape(cin_pad, cout_pad)
    else:
        # im2col weights keep the REAL cin: K = k*k*cin (no zero-padded MXU depth).
        w = jnp.pad(w, ((0, 0), (0, 0), (0, 0), (0, cout_pad - cout)))
        w = w.reshape(k * k * cin, cout_pad)
    b = jnp.pad(b, (0, cout_pad - cout))
    return w.astype(jnp.bfloat16), b.astype(jnp.float32)


def init_dw_bn(kg, c, k, eps=1e-3):
    cp = _round_up(c, 128)
    w = jax.random.normal(kg(), (c, k, k), jnp.float32) * (1.0 / (k * k)) ** 0.5
    gamma, beta, mean, var = _bn_params(kg, c)
    scale = gamma / jnp.sqrt(var + eps)
    w = w * scale[:, None, None]
    b = beta - mean * scale
    w = jnp.transpose(w, (1, 2, 0)).reshape(k * k, c)
    w = jnp.pad(w, ((0, 0), (0, cp - c)))
    b = jnp.pad(b, (0, cp - c))
    return w.astype(jnp.bfloat16), b.astype(jnp.float32)


def init_linear_raw(kg, cin, cout):
    w = jax.random.normal(kg(), (cin, cout), jnp.float32) * (1.0 / cin) ** 0.5
    b = 0.1 * jax.random.normal(kg(), (cout,), jnp.float32)
    return w, b


def init_se(kg, c_exp, sq):
    cp = _round_up(c_exp, 128)
    sqp = _round_up(sq, 128)
    w1, b1 = init_linear_raw(kg, c_exp, sq)
    w2, b2 = init_linear_raw(kg, sq, c_exp)
    w1 = jnp.pad(w1, ((0, cp - c_exp), (0, sqp - sq))).astype(jnp.bfloat16)
    b1 = jnp.pad(b1, (0, sqp - sq)).reshape(1, sqp).astype(jnp.float32)
    w2 = jnp.pad(w2, ((0, sqp - sq), (0, cp - c_exp))).astype(jnp.bfloat16)
    b2 = jnp.pad(b2, (0, cp - c_exp)).reshape(1, cp).astype(jnp.float32)
    return (w1, b1, w2, b2)


def init_classifier(kg):
    # efficientnet classifier Linear(1280,1000) composed with binaryClassifier Linear(1000,1)
    w_fc, b_fc = init_linear_raw(kg, 1280, 1000)
    w_bin, b_bin = init_linear_raw(kg, 1000, 1)
    w = w_fc @ w_bin                                          # (1280, 1)
    b = b_fc @ w_bin + b_bin                                  # (1,)
    w = jnp.pad(w, ((0, 0), (0, 127))).astype(jnp.bfloat16)   # (1280, 128)
    b = jnp.pad(b, (0, 127)).reshape(1, 128).astype(jnp.float32)
    return (w, b)


def _make_divisible(v, divisor=8, min_value=None):
    if min_value is None:
        min_value = divisor
    new_v = max(min_value, int(v + divisor / 2) // divisor * divisor)
    if new_v < 0.9 * v:
        new_v += divisor
    return new_v


# torchvision efficientnet_v2_s config:
# (block_type, expand_ratio, kernel, stride, in_ch, out_ch, num_layers)
STAGE_CFG = [
    ("fused", 1, 3, 1, 24, 24, 2),
    ("fused", 4, 3, 2, 24, 48, 4),
    ("fused", 4, 3, 2, 48, 64, 4),
    ("mbconv", 4, 3, 2, 64, 128, 6),
    ("mbconv", 6, 3, 1, 128, 160, 9),
    ("mbconv", 6, 3, 2, 160, 256, 15),
]


def init_params():
    kg = KeyGen(1)
    params = {"stem": init_conv_bn(kg, 3, 24, 3)}
    blocks = []
    for btype, ratio, k, stride, cin, cout, n in STAGE_CFG:
        for i in range(n):
            in_ch = cin if i == 0 else cout
            s = stride if i == 0 else 1
            exp = _make_divisible(in_ch * ratio)
            blk = {"type": btype, "k": k, "stride": s, "cin": in_ch,
                   "use_res": (s == 1 and in_ch == cout)}
            if btype == "fused":
                if exp != in_ch:
                    blk["expand"] = init_conv_bn(kg, in_ch, exp, k)
                    blk["project"] = init_conv_bn(kg, exp, cout, 1)
                else:
                    blk["conv"] = init_conv_bn(kg, in_ch, cout, k)
            else:
                sq = max(1, in_ch // 4)
                blk["expand"] = init_conv_bn(kg, in_ch, exp, 1)
                blk["dw"] = init_dw_bn(kg, exp, k)
                blk["se"] = init_se(kg, exp, sq)
                blk["project"] = init_conv_bn(kg, exp, cout, 1)
            blocks.append(blk)
    params["blocks"] = blocks
    params["head"] = init_conv_bn(kg, 256, 1280, 1)
    params["classifier"] = init_classifier(kg)
    return params


# ---------------------------------------------------------------------------
# Forward pass
# ---------------------------------------------------------------------------

def fused_mbconv_forward(x, p):
    res = x if p["use_res"] else None
    if "expand" in p:
        w, b = p["expand"]
        h = conv2d_bn_act(x, w, b, k=p["k"], stride=p["stride"], act="silu", cin=p["cin"])
        w, b = p["project"]
        h = conv2d_bn_act(h, w, b, residual=res, k=1, stride=1, act="none")
    else:
        w, b = p["conv"]
        h = conv2d_bn_act(x, w, b, residual=res, k=p["k"], stride=p["stride"],
                          act="silu", cin=p["cin"])
    # StochasticDepth is identity at inference.
    return h


def mbconv_forward(x, p):
    res = x if p["use_res"] else None
    w, b = p["expand"]
    h = conv2d_bn_act(x, w, b, k=1, stride=1, act="silu")
    w, b = p["dw"]
    if p["stride"] == 1:
        h, pooled = depthwise_conv_bn_silu_s1(h, w, b, k=p["k"])
    else:
        h = depthwise_conv_bn_silu_strided(h, w, b, k=p["k"], stride=p["stride"])
        pooled = jnp.sum(h.astype(jnp.float32), axis=(1, 2))
    N, Ho, Wo, Cexp = h.shape
    hw = Ho * Wo
    scale = se_scale_vec(pooled, *p["se"], hw=hw)             # (N, Cexp) sigmoid scale
    w, b = p["project"]
    Cout = w.shape[1]
    if _pick_tile(hw) is not None:
        # SE scale fused into the project matmul: the expanded tensor is not rewritten.
        a = h.reshape(N * hw, Cexp)
        r = res.reshape(N * hw, Cout) if res is not None else None
        out = matmul_bias_act(a, w, b, r, scale.reshape(N, 1, Cexp), act="none", hw=hw)
        return out.reshape(N, Ho, Wo, Cout)
    # Degenerate tiny spatial maps (H*W has no multiple-of-16 divisor): apply the
    # scale elementwise, then project normally.
    h = h * scale[:, None, None, :].astype(h.dtype)
    return conv2d_bn_act(h, w, b, residual=res, k=1, stride=1, act="none")


def my_efficientnet_forward(params, x_nchw):
    # NCHW -> NHWC; activations flow in bf16, channel-padded to multiples of 128.
    x = jnp.transpose(x_nchw, (0, 2, 3, 1)).astype(jnp.bfloat16)
    w, b = params["stem"]
    x = conv2d_bn_act(x, w, b, k=3, stride=2, act="silu", cin=3)
    for blk in params["blocks"]:
        if blk["type"] == "fused":
            x = fused_mbconv_forward(x, blk)
        else:
            x = mbconv_forward(x, blk)
    w, b = params["head"]
    x = conv2d_bn_act(x, w, b, k=1, stride=1, act="silu")          # 256 -> 1280
    # avgpool + flatten + Dropout(identity in eval) + Linear(1280,1000) + Linear(1000,1),
    # the two Linears pre-composed into a single 1280->1 matmul inside one kernel.
    w, b = params["classifier"]
    return gap_classifier(x, w, b)                                  # (N, 1) f32


if __name__ == "__main__":
    params = init_params()
    x = jax.random.normal(jax.random.PRNGKey(0), (2, 3, 64, 64), jnp.float32)
    out = my_efficientnet_forward(params, x)
    out = jax.block_until_ready(out)
    assert out.shape == (2, 1), out.shape
    assert bool(jnp.all(jnp.isfinite(out)))
    print("KERNEL_OK")
</pallas_src>

<mosaic_0001>
module attributes {stable_mosaic.version = 11 : i64} {
  func.func @kernel(%arg0: i32, %arg1: i32, %arg2: i32, %arg3: memref<512x27xbf16, #tpu.memory_space<vmem>>, %arg4: memref<27x128xbf16, #tpu.memory_space<vmem>>, %arg5: memref<1x128xf32, #tpu.memory_space<vmem>>, %arg6: memref<512x128xbf16, #tpu.memory_space<vmem>>, %arg7: memref<512x128xf32, #tpu.memory_space<vmem>>) attributes {dimension_semantics = [#tpu.dimension_semantics<parallel>, #tpu.dimension_semantics<parallel>, #tpu.dimension_semantics<arbitrary>], iteration_bounds = array<i64: 4, 1, 1>, scalar_prefetch = 0 : i64, scratch_operands = 1 : i64, tpu.core_type = #tpu.core_type<tc>, window_params = [{transform_indices = @transform_0, window_bounds = array<i64: 512, 27>}, {transform_indices = @transform_1, window_bounds = array<i64: 27, 128>}, {transform_indices = @transform_2, window_bounds = array<i64: 1, 128>}, {transform_indices = @transform_3, window_bounds = array<i64: 512, 128>}]} {
    %c0_i32 = arith.constant 0 : i32
    %0 = arith.cmpi eq, %arg2, %c0_i32 : i32
    %1 = arith.extui %0 : i1 to i32
    %c0_i32_0 = arith.constant 0 : i32
    %2 = arith.cmpi ne, %1, %c0_i32_0 : i32
    scf.if %2 {
      %cst_10 = arith.constant 0.000000e+00 : f32
      %12 = vector.broadcast %cst_10 : f32 to vector<512x128xf32>
      %c0_11 = arith.constant 0 : index
      %c0_12 = arith.constant 0 : index
      %13 = vector.load %arg7[%c0_11, %c0_12] : memref<512x128xf32, #tpu.memory_space<vmem>>, vector<512x128xf32>
      tpu.vector_store %arg7[%c0_11, %c0_12], %12 {strides = array<i32>} : memref<512x128xf32, #tpu.memory_space<vmem>>, vector<512x128xf32>,
    } else {
    }
    %c0 = arith.constant 0 : index
    %c0_1 = arith.constant 0 : index
    %3 = vector.load %arg3[%c0, %c0_1] : memref<512x27xbf16, #tpu.memory_space<vmem>>, vector<512x27xbf16>
    %c0_2 = arith.constant 0 : index
    %c0_3 = arith.constant 0 : index
    %4 = vector.load %arg7[%c0_2, %c0_3] : memref<512x128xf32, #tpu.memory_space<vmem>>, vector<512x128xf32>
    %c0_4 = arith.constant 0 : index
    %c0_5 = arith.constant 0 : index
    %5 = vector.load %arg4[%c0_4, %c0_5] : memref<27x128xbf16, #tpu.memory_space<vmem>>, vector<27x128xbf16>
    %cst = arith.constant dense<0.000000e+00> : vector<512x128xf32>
    %6 = tpu.matmul %3, %5, %cst {dimension_numbers = #tpu.dot_dimension_numbers<[1], [0], [0], [1], [0, 0, 1, 1], [], []>} : vector<512x27xbf16>, vector<27x128xbf16>, vector<512x128xf32> -> vector<512x128xf32>
    %7 = arith.addf %4, %6 : vector<512x128xf32>
    %c0_6 = arith.constant 0 : index
    %c0_7 = arith.constant 0 : index
    %8 = vector.load %arg7[%c0_6, %c0_7] : memref<512x128xf32, #tpu.memory_space<vmem>>, vector<512x128xf32>
    tpu.vector_store %arg7[%c0_6, %c0_7], %7 {strides = array<i32>} : memref<512x128xf32, #tpu.memory_space<vmem>>, vector<512x128xf32>,
    %c0_i32_8 = arith.constant 0 : i32
    %9 = arith.cmpi eq, %arg2, %c0_i32_8 : i32
    %10 = arith.extui %9 : i1 to i32
    %c0_i32_9 = arith.constant 0 : i32
    %11 = arith.cmpi ne, %10, %c0_i32_9 : i32
    scf.if %11 {
      %c0_10 = arith.constant 0 : index
      %c0_11 = arith.constant 0 : index
      %12 = vector.load %arg7[%c0_10, %c0_11] : memref<512x128xf32, #tpu.memory_space<vmem>>, vector<512x128xf32>
      %c0_12 = arith.constant 0 : index
      %c0_13 = arith.constant 0 : index
      %13 = vector.load %arg5[%c0_12, %c0_13] : memref<1x128xf32, #tpu.memory_space<vmem>>, vector<1x128xf32>
      %14 = vector.broadcast %13 : vector<1x128xf32> to vector<512x128xf32>
      %15 = arith.addf %12, %14 : vector<512x128xf32>
      %16 = arith.negf %15 : vector<512x128xf32>
      %17 = math.exp %16 : vector<512x128xf32>
      %cst_14 = arith.constant 1.000000e+00 : f32
      %18 = vector.broadcast %cst_14 : f32 to vector<512x128xf32>
      %19 = arith.addf %18, %17 : vector<512x128xf32>
      %20 = arith.divf %18, %19 : vector<512x128xf32>
      %21 = arith.mulf %15, %20 : vector<512x128xf32>
      %22 = arith.truncf %21 : vector<512x128xf32> to vector<512x128xbf16>
      %c0_15 = arith.constant 0 : index
      %c0_16 = arith.constant 0 : index
      %23 = vector.load %arg6[%c0_15, %c0_16] : memref<512x128xbf16, #tpu.memory_space<vmem>>, vector<512x128xbf16>
      tpu.vector_store %arg6[%c0_15, %c0_16], %22 {strides = array<i32>} : memref<512x128xbf16, #tpu.memory_space<vmem>>, vector<512x128xbf16>,
    } else {
    }
    return
  }
  func.func @transform_0(%arg0: i32, %arg1: i32, %arg2: i32) -> (i32, i32) {
    %c0_i32 = arith.constant 0 : i32
    return %arg0, %arg2 : i32, i32
  }
  func.func @transform_1(%arg0: i32, %arg1: i32, %arg2: i32) -> (i32, i32) {
    %c0_i32 = arith.constant 0 : i32
    return %arg2, %arg1 : i32, i32
  }
  func.func @transform_2(%arg0: i32, %arg1: i32, %arg2: i32) -> (i32, i32) {
    %c0_i32 = arith.constant 0 : i32
    %c0_i32_0 = arith.constant 0 : i32
    return %c0_i32, %arg1 : i32, i32
  }
  func.func @transform_3(%arg0: i32, %arg1: i32, %arg2: i32) -> (i32, i32) {
    %c0_i32 = arith.constant 0 : i32
    return %arg0, %arg1 : i32, i32
  }
}

</mosaic_0001>

<llo_original>
// kernel: matmul_bias_act.1
$region0: #{matmul_bias_act.1}
  #allocation0 [shape = 'u32[]', space=smem, size = 0x4, offset = 0x4, fixed_abs, tag = 'smem constant byte address 0x4 - core index']
  #allocation1 [shape = 'u32[144,128]{1,0:T(1,128)}', space=vmem, size = 0x12000, scoped, tag = 'internal scratch']
  #allocation2 [shape = 'f32[512,128]{1,0:T(8,128)}', space=vmem, size = 0x40000, scoped, tag = 'scratch operand']
  %s0 = inlined_call_operand.vmem [shape: bf16[2048,27], index: 0, kind: input, shape index: {}]
  %s1 = inlined_call_operand.vmem [shape: bf16[27,128], index: 1, kind: input, shape index: {}]
  %s2 = inlined_call_operand.vmem [shape: f32[1,128], index: 2, kind: input, shape index: {}]
  %s3 = inlined_call_operand.hbm [shape: bf16[2048,128], index: 3, kind: output, shape index: {}]
  %s4 = sld [smem:[#allocation0]]
  $region53: #{matmul_bias_act.1} parent=0
    _
  %s6 = ssub.s32 1, %s4
  %s7 = scalar_select 0, %s6, %s4
  $region1: #{matmul_bias_act.1} parent=0
    #allocation3 [shape = 'u8[262144]{0}', space=vmem, size = 0x40000, scoped, tag = 'output window, operand 0']
    #allocation4 [shape = 's32[2]{0}', space=sflag, size = 0x8, scoped, tag = 'scoped memory for matmul_bias_act.1']
    %8 = vsyncpa [#allocation4], 0
    %s9 = scalar_lea.sflag [#allocation4], 1
    %10 = vsyncpa %s9, 0
    loop: start=0, step=1, limit=6
    $region2: #{matmul_bias_act.1} parent=1 // loop_pre_header
      _
    $region3: #{matmul_bias_act.1} parent=1 // loop_header
      %s12 = sphi 0, %s16
      %p13 = scmp.ge.s32.totalorder %s12, 6
      %s19 = sphi 0, %s38
      %s20 = sphi 0, %s34
      %s21 = sphi 0, %s30
      %s22 = sphi 0, %s19
      %s23 = sphi 0, %s20
      %s24 = sphi 0, %s21
      %s25 = sphi 0, %s22
      %s26 = sphi 0, %s23
      %s27 = sphi 0, %s24
      %s43 = sphi 0, %s45
      %s46 = sphi 0, %s43
      %s47 = sphi 0, %s46
      %s63 = sphi 0, %s47
      %s71 = sphi 0, %s73
      %s74 = sphi 0, %s71
      %s75 = sphi 0, %s74
      %s91 = sphi 0, %s75
      %s97 = sphi 0, %s99
      %s100 = sphi 0, %s97
      %s101 = sphi 0, %s100
      %s117 = sphi 0, %s101
      %s125 = sphi 0, %s127
      %s128 = sphi 0, %s125
      %s129 = sphi 0, %s128
      %s145 = sphi 0, %s129
    $region4: #{matmul_bias_act.1} parent=1 // loop_header_branch
      %15 = sbr.rel (%p13) target = $region8
    $region5: #{matmul_bias_act.1} parent=1 // loop_body
      %s17 = ssub.s32 %s12, 1
      %s18 = ssub.s32 %s12, 2
      %s28 = sadd.s32 1, %s21
      %p29 = scmp.ge.s32.totalorder %s28, 1
      %s30 = scalar_select %p29, 0, %s28
      %s31 = sadd.s32 1, %s20
      %s32 = scalar_select %p29, %s31, %s20
      %p33 = scmp.ge.s32.totalorder %s32, 1
      %s34 = scalar_select %p33, 0, %s32
      %s35 = sadd.s32 1, %s19
      %s36 = scalar_select %p33, %s35, %s19
      %p37 = scmp.ge.s32.totalorder %s36, 4
      %s38 = scalar_select %p37, 0, %s36
      %s39 = ssub.s32 %s19, %s38
      %s40 = ssub.s32 %s21, %s30
      %s41 = sor.u32 %s39, %s40
      %p42 = scmp.eq.s32.totalorder %s41, 0
      %s44 = sadd.s32 %s43, 1
      %s45 = scalar_select %p42, %s43, %s44
      %p48 = pneg %p42
      %p49 = scmp.eq.s32.totalorder %s12, 3
      %p50 = por %p48, %p49
      %p51 = scmp.ne.s32.totalorder %s43, %s46
      %p52 = scmp.eq.s32.totalorder %s12, 0
      %p53 = por %p51, %p52
      %p54 = scmp.ne.s32.totalorder %s43, %s46
      %p55 = scmp.eq.s32.totalorder %s17, 3
      %p56 = por %p54, %p55
      %p57 = scmp.ne.s32.totalorder %s46, %s47
      %p58 = scmp.eq.s32.totalorder %s17, 0
      %p59 = por %p57, %p58
      %p60 = scmp.ne.s32.totalorder %s46, %s47
      %p61 = scmp.eq.s32.totalorder %s18, 3
      %p62 = por %p60, %p61
      %p64 = scmp.ne.s32.totalorder %s47, %s63
      %p65 = scmp.eq.s32.totalorder %s18, 0
      %p66 = por %p64, %p65
      %s67 = ssub.s32 %s21, %s30
      %s68 = ssub.s32 %s20, %s34
      %s69 = sor.u32 %s67, %s68
      %p70 = scmp.eq.s32.totalorder %s69, 0
      %s72 = sadd.s32 %s71, 1
      %s73 = scalar_select %p70, %s71, %s72
      %p76 = pneg %p70
      %p77 = scmp.eq.s32.totalorder %s12, 3
      %p78 = por %p76, %p77
      %p79 = scmp.ne.s32.totalorder %s71, %s74
      %p80 = scmp.eq.s32.totalorder %s12, 0
      %p81 = por %p79, %p80
      %p82 = scmp.ne.s32.totalorder %s71, %s74
      %p83 = scmp.eq.s32.totalorder %s17, 3
      %p84 = por %p82, %p83
      %p85 = scmp.ne.s32.totalorder %s74, %s75
      %p86 = scmp.eq.s32.totalorder %s17, 0
      %p87 = por %p85, %p86
      %p88 = scmp.ne.s32.totalorder %s74, %s75
      %p89 = scmp.eq.s32.totalorder %s18, 3
      %p90 = por %p88, %p89
      %p92 = scmp.ne.s32.totalorder %s75, %s91
      %p93 = scmp.eq.s32.totalorder %s18, 0
      %p94 = por %p92, %p93
      %s95 = ssub.s32 %s20, %s34
      %p96 = scmp.eq.s32.totalorder %s95, 0
      %s98 = sadd.s32 %s97, 1
      %s99 = scalar_select %p96, %s97, %s98
      %p102 = pneg %p96
      %p103 = scmp.eq.s32.totalorder %s12, 3
      %p104 = por %p102, %p103
      %p105 = scmp.ne.s32.totalorder %s97, %s100
      %p106 = scmp.eq.s32.totalorder %s12, 0
      %p107 = por %p105, %p106
      %p108 = scmp.ne.s32.totalorder %s97, %s100
      %p109 = scmp.eq.s32.totalorder %s17, 3
      %p110 = por %p108, %p109
      %p111 = scmp.ne.s32.totalorder %s100, %s101
      %p112 = scmp.eq.s32.totalorder %s17, 0
      %p113 = por %p111, %p112
      %p114 = scmp.ne.s32.totalorder %s100, %s101
      %p115 = scmp.eq.s32.totalorder %s18, 3
      %p116 = por %p114, %p115
      %p118 = scmp.ne.s32.totalorder %s101, %s117
      %p119 = scmp.eq.s32.totalorder %s18, 0
      %p120 = por %p118, %p119
      %s121 = ssub.s32 %s19, %s38
      %s122 = ssub.s32 %s20, %s34
      %s123 = sor.u32 %s121, %s122
      %p124 = scmp.eq.s32.totalorder %s123, 0
      %s126 = sadd.s32 %s125, 1
      %s127 = scalar_select %p124, %s125, %s126
      %p130 = pneg %p124
      %p131 = scmp.eq.s32.totalorder %s12, 3
      %p132 = por %p130, %p131
      %p133 = scmp.ne.s32.totalorder %s125, %s128
      %p134 = scmp.eq.s32.totalorder %s12, 0
      %p135 = por %p133, %p134
      %p136 = scmp.ne.s32.totalorder %s125, %s128
      %p137 = scmp.eq.s32.totalorder %s17, 3
      %p138 = por %p136, %p137
      %p139 = scmp.ne.s32.totalorder %s128, %s129
      %p140 = scmp.eq.s32.totalorder %s17, 0
      %p141 = por %p139, %p140
      %p142 = scmp.ne.s32.totalorder %s128, %s129
      %p143 = scmp.eq.s32.totalorder %s18, 3
      %p144 = por %p142, %p143
      %p146 = scmp.ne.s32.totalorder %s129, %s145
      %p147 = scmp.eq.s32.totalorder %s18, 0
      %p148 = por %p146, %p147
      %p149 = scmp.le.s32.totalorder 1, %s12
      %p150 = scmp.lt.s32.totalorder %s12, 5
      %p151 = pnand %p149, %p150
      %p152 = pneg %p151
      // Predicated region
      $region9: #{matmul_bias_act.1} parent=5 // pred_check
        _
      $region10: #{matmul_bias_act.1} parent=5 // pred_check_branch
        %154 = sbr.rel (%p151) target = $region12
      $region11: #{matmul_bias_act.1} parent=5 // pred_region
        %s155 = ssub.s32 %s12, 1
        // Predicated region
        $region13: #{matmul_bias_act.1} parent=11 // pred_check
          %p156 = pneg %p87
        $region14: #{matmul_bias_act.1} parent=11 // pred_check_branch
          %158 = sbr.rel (%p156) target = $region16
        $region15: #{matmul_bias_act.1} parent=11 // pred_region
          %s159 = smul.u32 4, %s24
          %p160 = scmp.lt.s32.totalorder %s159, 3
          %s161 = scalar_select %p160, %s159, 3
          %p162 = scmp.lt.s32.totalorder %s23, 0
          %s163 = scalar_select %p162, %s23, 0
          %s164 = sadd.s32 %s163, %s161
          %s165 = smul.addr %s164, 4
          %s166 = scalar_lea.vmem %s1, %s165
          %s167 = smul.u32 4, %s24
        $region16: #{matmul_bias_act.1} parent=11 // pred_fallthru
          _
        // Predicated region
        $region17: #{matmul_bias_act.1} parent=11 // pred_check
          %p168 = pneg %p113
        $region18: #{matmul_bias_act.1} parent=11 // pred_check_branch
          %170 = sbr.rel (%p168) target = $region20
        $region19: #{matmul_bias_act.1} parent=11 // pred_region
          %p171 = scmp.lt.s32.totalorder %s23, 0
          %s172 = scalar_select %p171, %s23, 0
          %s173 = scalar_lea.vmem %s2, %s172
        $region20: #{matmul_bias_act.1} parent=11 // pred_fallthru
          _
      $region12: #{matmul_bias_act.1} parent=5 // pred_fallthru
        _
      %p174 = scmp.lt.s32.totalorder %s12, 4
      // Predicated region
      $region21: #{matmul_bias_act.1} parent=5 // pred_check
        %p175 = pneg %p174
      $region22: #{matmul_bias_act.1} parent=5 // pred_check_branch
        %177 = sbr.rel (%p175) target = $region24
      $region23: #{matmul_bias_act.1} parent=5 // pred_region
        // Predicated region
        $region25: #{matmul_bias_act.1} parent=23 // pred_check
          %p178 = pneg %p53
        $region26: #{matmul_bias_act.1} parent=23 // pred_check_branch
          %180 = sbr.rel (%p178) target = $region28
        $region27: #{matmul_bias_act.1} parent=23 // pred_region
          %s181 = smul.u32 64, %s19
          %p182 = scmp.lt.s32.totalorder %s181, 255
          %s183 = scalar_select %p182, %s181, 255
          %p184 = scmp.lt.s32.totalorder %s21, 0
          %s185 = scalar_select %p184, %s21, 0
          %s186 = sadd.s32 %s185, %s183
          %s187 = smul.addr %s186, 4
          %s188 = scalar_lea.vmem %s0, %s187
          %s189 = smul.u32 64, %s19
        $region28: #{matmul_bias_act.1} parent=23 // pred_fallthru
          _
      $region24: #{matmul_bias_act.1} parent=5 // pred_fallthru
        _
      %p190 = scmp.le.s32.totalorder 1, %s12
      %p191 = scmp.lt.s32.totalorder %s12, 5
      %p192 = pnand %p190, %p191
      %p193 = pneg %p192
      // Predicated region
      $region29: #{matmul_bias_act.1} parent=5 // pred_check
        _
      $region30: #{matmul_bias_act.1} parent=5 // pred_check_branch
        %195 = sbr.rel (%p192) target = $region32
      $region31: #{matmul_bias_act.1} parent=5 // pred_region
        %s196 = ssub.s32 %s12, 1
        %s197 = smul.u32 64, %s22
        %p198 = scmp.lt.s32.totalorder %s197, 255
        %s199 = scalar_select %p198, %s197, 255
        %p200 = scmp.lt.s32.totalorder %s24, 0
        %s201 = scalar_select %p200, %s24, 0
        %s202 = sadd.s32 %s201, %s199
        %s203 = smul.addr %s202, 4
        %s204 = scalar_lea.vmem %s0, %s203
        %p205 = pneg %p59
        %p206 = pneg %p56
        %s207 = smul.u32 4, %s24
        %p208 = scmp.lt.s32.totalorder %s207, 3
        %s209 = scalar_select %p208, %s207, 3
        %p210 = scmp.lt.s32.totalorder %s23, 0
        %s211 = scalar_select %p210, %s23, 0
        %s212 = sadd.s32 %s211, %s209
        %s213 = smul.addr %s212, 4
        %s214 = scalar_lea.vmem %s1, %s213
        %p215 = pneg %p87
        %p216 = pneg %p84
        %p217 = scmp.lt.s32.totalorder %s23, 0
        %s218 = scalar_select %p217, %s23, 0
        %s219 = scalar_lea.vmem %s2, %s218
        %p220 = pneg %p113
        %p221 = pneg %p110
        %p222 = pneg %p141
        %p223 = pneg %p138
        %s224 = sand.u32 %s128, 1
        %s225 = scalar_lea.sflag [#allocation4], %s224
        %s226 = sand.u32 %s128, 1
        %s227 = smul.addr %s226, 256
        %s228 = scalar_lea.vmem [#allocation3], %s227
        %s229 = smul.u32 64, %s22
        %p230 = scmp.lt.s32.totalorder %s229, 255
        %s231 = scalar_select %p230, %s229, 255
        %p232 = scmp.lt.s32.totalorder %s24, 0
        %s233 = scalar_select %p232, %s24, 0
        %s234 = sadd.s32 %s233, %s231
        %s235 = smul.addr %s234, 4
        %s236 = scalar_lea.vmem %s0, %s235
        %s237 = smul.u32 64, %s22
        %s238 = smul.u32 4, %s24
        %p239 = scmp.lt.s32.totalorder %s238, 3
        %s240 = scalar_select %p239, %s238, 3
        %p241 = scmp.lt.s32.totalorder %s23, 0
        %s242 = scalar_select %p241, %s23, 0
        %s243 = sadd.s32 %s242, %s240
        %s244 = smul.addr %s243, 4
        %s245 = scalar_lea.vmem %s1, %s244
        %s246 = smul.u32 4, %s24
        %p247 = scmp.lt.s32.totalorder %s23, 0
        %s248 = scalar_select %p247, %s23, 0
        %s249 = scalar_lea.vmem %s2, %s248
        %s250 = smul.u32 64, %s22
        %p252 = scmp.eq.s32.totalorder %s24, 0
        // Predicated region
        $region33: #{matmul_bias_act.1} parent=31 // pred_check
          %p253 = pneg %p252
        $region34: #{matmul_bias_act.1} parent=31 // pred_check_branch
          %255 = sbr.rel (%p253) target = $region36
        $region35: #{matmul_bias_act.1} parent=31 // pred_region
          %256 = vst [vmem:[#allocation2] sm:$0xff] 0.0
          %257 = vst [vmem:[#allocation2 + $0x8] sm:$0xff] 0.0
          %258 = vst [vmem:[#allocation2 + $0x10] sm:$0xff] 0.0
          %259 = vst [vmem:[#allocation2 + $0x18] sm:$0xff] 0.0
          %260 = vst [vmem:[#allocation2 + $0x20] sm:$0xff] 0.0
          %261 = vst [vmem:[#allocation2 + $0x28] sm:$0xff] 0.0
          %262 = vst [vmem:[#allocation2 + $0x30] sm:$0xff] 0.0
          %263 = vst [vmem:[#allocation2 + $0x38] sm:$0xff] 0.0
          %264 = vst [vmem:[#allocation2 + $0x40] sm:$0xff] 0.0
          %265 = vst [vmem:[#allocation2 + $0x48] sm:$0xff] 0.0
          %266 = vst [vmem:[#allocation2 + $0x50] sm:$0xff] 0.0
          %267 = vst [vmem:[#allocation2 + $0x58] sm:$0xff] 0.0
          %268 = vst [vmem:[#allocation2 + $0x60] sm:$0xff] 0.0
          %269 = vst [vmem:[#allocation2 + $0x68] sm:$0xff] 0.0
          %270 = vst [vmem:[#allocation2 + $0x70] sm:$0xff] 0.0
          %271 = vst [vmem:[#allocation2 + $0x78] sm:$0xff] 0.0
          %272 = vst [vmem:[#allocation2 + $0x80] sm:$0xff] 0.0
          %273 = vst [vmem:[#allocation2 + $0x88] sm:$0xff] 0.0
          %274 = vst [vmem:[#allocation2 + $0x90] sm:$0xff] 0.0
          %275 = vst [vmem:[#allocation2 + $0x98] sm:$0xff] 0.0
          %276 = vst [vmem:[#allocation2 + $0xa0] sm:$0xff] 0.0
          %277 = vst [vmem:[#allocation2 + $0xa8] sm:$0xff] 0.0
          %278 = vst [vmem:[#allocation2 + $0xb0] sm:$0xff] 0.0
          %279 = vst [vmem:[#allocation2 + $0xb8] sm:$0xff] 0.0
          %280 = vst [vmem:[#allocation2 + $0xc0] sm:$0xff] 0.0
          %281 = vst [vmem:[#allocation2 + $0xc8] sm:$0xff] 0.0
          %282 = vst [vmem:[#allocation2 + $0xd0] sm:$0xff] 0.0
          %283 = vst [vmem:[#allocation2 + $0xd8] sm:$0xff] 0.0
          %284 = vst [vmem:[#allocation2 + $0xe0] sm:$0xff] 0.0
          %285 = vst [vmem:[#allocation2 + $0xe8] sm:$0xff] 0.0
          %286 = vst [vmem:[#allocation2 + $0xf0] sm:$0xff] 0.0
          %287 = vst [vmem:[#allocation2 + $0xf8] sm:$0xff] 0.0
          %288 = vst [vmem:[#allocation2 + $0x100] sm:$0xff] 0.0
          %289 = vst [vmem:[#allocation2 + $0x108] sm:$0xff] 0.0
          %290 = vst [vmem:[#allocation2 + $0x110] sm:$0xff] 0.0
          %291 = vst [vmem:[#allocation2 + $0x118] sm:$0xff] 0.0
          %292 = vst [vmem:[#allocation2 + $0x120] sm:$0xff] 0.0
          %293 = vst [vmem:[#allocation2 + $0x128] sm:$0xff] 0.0
          %294 = vst [vmem:[#allocation2 + $0x130] sm:$0xff] 0.0
          %295 = vst [vmem:[#allocation2 + $0x138] sm:$0xff] 0.0
          %296 = vst [vmem:[#allocation2 + $0x140] sm:$0xff] 0.0
          %297 = vst [vmem:[#allocation2 + $0x148] sm:$0xff] 0.0
          %298 = vst [vmem:[#allocation2 + $0x150] sm:$0xff] 0.0
          %299 = vst [vmem:[#allocation2 + $0x158] sm:$0xff] 0.0
          %300 = vst [vmem:[#allocation2 + $0x160] sm:$0xff] 0.0
          %301 = vst [vmem:[#allocation2 + $0x168] sm:$0xff] 0.0
          %302 = vst [vmem:[#allocation2 + $0x170] sm:$0xff] 0.0
          %303 = vst [vmem:[#allocation2 + $0x178] sm:$0xff] 0.0
          %304 = vst [vmem:[#allocation2 + $0x180] sm:$0xff] 0.0
          %305 = vst [vmem:[#allocation2 + $0x188] sm:$0xff] 0.0
          %306 = vst [vmem:[#allocation2 + $0x190] sm:$0xff] 0.0
          %307 = vst [vmem:[#allocation2 + $0x198] sm:$0xff] 0.0
          %308 = vst [vmem:[#allocation2 + $0x1a0] sm:$0xff] 0.0
          %309 = vst [vmem:[#allocation2 + $0x1a8] sm:$0xff] 0.0
          %310 = vst [vmem:[#allocation2 + $0x1b0] sm:$0xff] 0.0
          %311 = vst [vmem:[#allocation2 + $0x1b8] sm:$0xff] 0.0
          %312 = vst [vmem:[#allocation2 + $0x1c0] sm:$0xff] 0.0
          %313 = vst [vmem:[#allocation2 + $0x1c8] sm:$0xff] 0.0
          %314 = vst [vmem:[#allocation2 + $0x1d0] sm:$0xff] 0.0
          %315 = vst [vmem:[#allocation2 + $0x1d8] sm:$0xff] 0.0
          %316 = vst [vmem:[#allocation2 + $0x1e0] sm:$0xff] 0.0
          %317 = vst [vmem:[#allocation2 + $0x1e8] sm:$0xff] 0.0
          %318 = vst [vmem:[#allocation2 + $0x1f0] sm:$0xff] 0.0
          %319 = vst [vmem:[#allocation2 + $0x1f8] sm:$0xff] 0.0
        $region36: #{matmul_bias_act.1} parent=31 // pred_fallthru
          _
        %v320 = vld [vmem:[%s236] sm:$0xf]
        %v321 = vld [vmem:[%s236 + $0x4] sm:$0xf]
        %v322 = vld [vmem:[%s236 + $0x8] sm:$0xf]
        %v323 = vld [vmem:[%s236 + $0xc] sm:$0xf]
        %v324 = vld [vmem:[%s236 + $0x10] sm:$0xf]
        %v325 = vld [vmem:[%s236 + $0x14] sm:$0xf]
        %v326 = vld [vmem:[%s236 + $0x18] sm:$0xf]
        %v327 = vld [vmem:[%s236 + $0x1c] sm:$0xf]
        %v328 = vld [vmem:[%s236 + $0x20] sm:$0xf]
        %v329 = vld [vmem:[%s236 + $0x24] sm:$0xf]
        %v330 = vld [vmem:[%s236 + $0x28] sm:$0xf]
        %v331 = vld [vmem:[%s236 + $0x2c] sm:$0xf]
        %v332 = vld [vmem:[%s236 + $0x30] sm:$0xf]
        %v333 = vld [vmem:[%s236 + $0x34] sm:$0xf]
        %v334 = vld [vmem:[%s236 + $0x38] sm:$0xf]
        %v335 = vld [vmem:[%s236 + $0x3c] sm:$0xf]
        %v336 = vld [vmem:[%s236 + $0x40] sm:$0xf]
        %v337 = vld [vmem:[%s236 + $0x44] sm:$0xf]
        %v338 = vld [vmem:[%s236 + $0x48] sm:$0xf]
        %v339 = vld [vmem:[%s236 + $0x4c] sm:$0xf]
        %v340 = vld [vmem:[%s236 + $0x50] sm:$0xf]
        %v341 = vld [vmem:[%s236 + $0x54] sm:$0xf]
        %v342 = vld [vmem:[%s236 + $0x58] sm:$0xf]
        %v343 = vld [vmem:[%s236 + $0x5c] sm:$0xf]
        %v344 = vld [vmem:[%s236 + $0x60] sm:$0xf]
        %v345 = vld [vmem:[%s236 + $0x64] sm:$0xf]
        %v346 = vld [vmem:[%s236 + $0x68] sm:$0xf]
        %v347 = vld [vmem:[%s236 + $0x6c] sm:$0xf]
        %v348 = vld [vmem:[%s236 + $0x70] sm:$0xf]
        %v349 = vld [vmem:[%s236 + $0x74] sm:$0xf]
        %v350 = vld [vmem:[%s236 + $0x78] sm:$0xf]
        %v351 = vld [vmem:[%s236 + $0x7c] sm:$0xf]
        %v352 = vld [vmem:[%s236 + $0x80] sm:$0xf]
        %v353 = vld [vmem:[%s236 + $0x84] sm:$0xf]
        %v354 = vld [vmem:[%s236 + $0x88] sm:$0xf]
        %v355 = vld [vmem:[%s236 + $0x8c] sm:$0xf]
        %v356 = vld [vmem:[%s236 + $0x90] sm:$0xf]
        %v357 = vld [vmem:[%s236 + $0x94] sm:$0xf]
        %v358 = vld [vmem:[%s236 + $0x98] sm:$0xf]
        %v359 = vld [vmem:[%s236 + $0x9c] sm:$0xf]
        %v360 = vld [vmem:[%s236 + $0xa0] sm:$0xf]
        %v361 = vld [vmem:[%s236 + $0xa4] sm:$0xf]
        %v362 = vld [vmem:[%s236 + $0xa8] sm:$0xf]
        %v363 = vld [vmem:[%s236 + $0xac] sm:$0xf]
        %v364 = vld [vmem:[%s236 + $0xb0] sm:$0xf]
        %v365 = vld [vmem:[%s236 + $0xb4] sm:$0xf]
        %v366 = vld [vmem:[%s236 + $0xb8] sm:$0xf]
        %v367 = vld [vmem:[%s236 + $0xbc] sm:$0xf]
        %v368 = vld [vmem:[%s236 + $0xc0] sm:$0xf]
        %v369 = vld [vmem:[%s236 + $0xc4] sm:$0xf]
        %v370 = vld [vmem:[%s236 + $0xc8] sm:$0xf]
        %v371 = vld [vmem:[%s236 + $0xcc] sm:$0xf]
        %v372 = vld [vmem:[%s236 + $0xd0] sm:$0xf]
        %v373 = vld [vmem:[%s236 + $0xd4] sm:$0xf]
        %v374 = vld [vmem:[%s236 + $0xd8] sm:$0xf]
        %v375 = vld [vmem:[%s236 + $0xdc] sm:$0xf]
        %v376 = vld [vmem:[%s236 + $0xe0] sm:$0xf]
        %v377 = vld [vmem:[%s236 + $0xe4] sm:$0xf]
        %v378 = vld [vmem:[%s236 + $0xe8] sm:$0xf]
        %v379 = vld [vmem:[%s236 + $0xec] sm:$0xf]
        %v380 = vld [vmem:[%s236 + $0xf0] sm:$0xf]
        %v381 = vld [vmem:[%s236 + $0xf4] sm:$0xf]
        %v382 = vld [vmem:[%s236 + $0xf8] sm:$0xf]
        %v383 = vld [vmem:[%s236 + $0xfc] sm:$0xf]
        %v384 = vld [vmem:[#allocation2] sm:$0xff]
        %v385 = vld [vmem:[#allocation2 + $0x8] sm:$0xff]
        %v386 = vld [vmem:[#allocation2 + $0x10] sm:$0xff]
        %v387 = vld [vmem:[#allocation2 + $0x18] sm:$0xff]
        %v388 = vld [vmem:[#allocation2 + $0x20] sm:$0xff]
        %v389 = vld [vmem:[#allocation2 + $0x28] sm:$0xff]
        %v390 = vld [vmem:[#allocation2 + $0x30] sm:$0xff]
        %v391 = vld [vmem:[#allocation2 + $0x38] sm:$0xff]
        %v392 = vld [vmem:[#allocation2 + $0x40] sm:$0xff]
        %v393 = vld [vmem:[#allocation2 + $0x48] sm:$0xff]
        %v394 = vld [vmem:[#allocation2 + $0x50] sm:$0xff]
        %v395 = vld [vmem:[#allocation2 + $0x58] sm:$0xff]
        %v396 = vld [vmem:[#allocation2 + $0x60] sm:$0xff]
        %v397 = vld [vmem:[#allocation2 + $0x68] sm:$0xff]
        %v398 = vld [vmem:[#allocation2 + $0x70] sm:$0xff]
        %v399 = vld [vmem:[#allocation2 + $0x78] sm:$0xff]
        %v400 = vld [vmem:[#allocation2 + $0x80] sm:$0xff]
        %v401 = vld [vmem:[#allocation2 + $0x88] sm:$0xff]
        %v402 = vld [vmem:[#allocation2 + $0x90] sm:$0xff]
        %v403 = vld [vmem:[#allocation2 + $0x98] sm:$0xff]
        %v404 = vld [vmem:[#allocation2 + $0xa0] sm:$0xff]
        %v405 = vld [vmem:[#allocation2 + $0xa8] sm:$0xff]
        %v406 = vld [vmem:[#allocation2 + $0xb0] sm:$0xff]
        %v407 = vld [vmem:[#allocation2 + $0xb8] sm:$0xff]
        %v408 = vld [vmem:[#allocation2 + $0xc0] sm:$0xff]
        %v409 = vld [vmem:[#allocation2 + $0xc8] sm:$0xff]
        %v410 = vld [vmem:[#allocation2 + $0xd0] sm:$0xff]
        %v411 = vld [vmem:[#allocation2 + $0xd8] sm:$0xff]
        %v412 = vld [vmem:[#allocation2 + $0xe0] sm:$0xff]
        %v413 = vld [vmem:[#allocation2 + $0xe8] sm:$0xff]
        %v414 = vld [vmem:[#allocation2 + $0xf0] sm:$0xff]
        %v415 = vld [vmem:[#allocation2 + $0xf8] sm:$0xff]
        %v416 = vld [vmem:[#allocation2 + $0x100] sm:$0xff]
        %v417 = vld [vmem:[#allocation2 + $0x108] sm:$0xff]
        %v418 = vld [vmem:[#allocation2 + $0x110] sm:$0xff]
        %v419 = vld [vmem:[#allocation2 + $0x118] sm:$0xff]
        %v420 = vld [vmem:[#allocation2 + $0x120] sm:$0xff]
        %v421 = vld [vmem:[#allocation2 + $0x128] sm:$0xff]
        %v422 = vld [vmem:[#allocation2 + $0x130] sm:$0xff]
        %v423 = vld [vmem:[#allocation2 + $0x138] sm:$0xff]
        %v424 = vld [vmem:[#allocation2 + $0x140] sm:$0xff]
        %v425 = vld [vmem:[#allocation2 + $0x148] sm:$0xff]
        %v426 = vld [vmem:[#allocation2 + $0x150] sm:$0xff]
        %v427 = vld [vmem:[#allocation2 + $0x158] sm:$0xff]
        %v428 = vld [vmem:[#allocation2 + $0x160] sm:$0xff]
        %v429 = vld [vmem:[#allocation2 + $0x168] sm:$0xff]
        %v430 = vld [vmem:[#allocation2 + $0x170] sm:$0xff]
        %v431 = vld [vmem:[#allocation2 + $0x178] sm:$0xff]
        %v432 = vld [vmem:[#allocation2 + $0x180] sm:$0xff]
        %v433 = vld [vmem:[#allocation2 + $0x188] sm:$0xff]
        %v434 = vld [vmem:[#allocation2 + $0x190] sm:$0xff]
        %v435 = vld [vmem:[#allocation2 + $0x198] sm:$0xff]
        %v436 = vld [vmem:[#allocation2 + $0x1a0] sm:$0xff]
        %v437 = vld [vmem:[#allocation2 + $0x1a8] sm:$0xff]
        %v438 = vld [vmem:[#allocation2 + $0x1b0] sm:$0xff]
        %v439 = vld [vmem:[#allocation2 + $0x1b8] sm:$0xff]
        %v440 = vld [vmem:[#allocation2 + $0x1c0] sm:$0xff]
        %v441 = vld [vmem:[#allocation2 + $0x1c8] sm:$0xff]
        %v442 = vld [vmem:[#allocation2 + $0x1d0] sm:$0xff]
        %v443 = vld [vmem:[#allocation2 + $0x1d8] sm:$0xff]
        %v444 = vld [vmem:[#allocation2 + $0x1e0] sm:$0xff]
        %v445 = vld [vmem:[#allocation2 + $0x1e8] sm:$0xff]
        %v446 = vld [vmem:[#allocation2 + $0x1f0] sm:$0xff]
        %v447 = vld [vmem:[#allocation2 + $0x1f8] sm:$0xff]
        %v448 = vld [vmem:[%s245] sm:$0xf]
        %v449 = vld [vmem:[%s245 + $0x4] sm:$0xf]
        %v450 = vld [vmem:[%s245 + $0x8] sm:$0xf]
        %v451 = vld [vmem:[%s245 + $0xc] sm:$0x3]
        %v516 = vunpack.c.l.b16 %v320
        %v517 = vunpack.c.l.b16 %v321
        %v518 = vunpack.c.l.b16 %v322
        %v519 = vunpack.c.l.b16 %v323
        %v520 = vunpack.c.l.b16 %v324
        %v521 = vunpack.c.l.b16 %v325
        %v522 = vunpack.c.l.b16 %v326
        %v523 = vunpack.c.l.b16 %v327
        %v524 = vunpack.c.l.b16 %v328
        %v525 = vunpack.c.l.b16 %v329
        %v526 = vunpack.c.l.b16 %v330
        %v527 = vunpack.c.l.b16 %v331
        %v528 = vunpack.c.l.b16 %v332
        %v529 = vunpack.c.l.b16 %v333
        %v530 = vunpack.c.l.b16 %v334
        %v531 = vunpack.c.l.b16 %v335
        %v532 = vunpack.c.l.b16 %v336
        %v533 = vunpack.c.l.b16 %v337
        %v534 = vunpack.c.l.b16 %v338
        %v535 = vunpack.c.l.b16 %v339
        %v536 = vunpack.c.l.b16 %v340
        %v537 = vunpack.c.l.b16 %v341
        %v538 = vunpack.c.l.b16 %v342
        %v539 = vunpack.c.l.b16 %v343
        %v540 = vunpack.c.l.b16 %v344
        %v541 = vunpack.c.l.b16 %v345
        %v542 = vunpack.c.l.b16 %v346
        %v543 = vunpack.c.l.b16 %v347
        %v544 = vunpack.c.l.b16 %v348
        %v545 = vunpack.c.l.b16 %v349
        %v546 = vunpack.c.l.b16 %v350
        %v547 = vunpack.c.l.b16 %v351
        %v548 = vunpack.c.l.b16 %v352
        %v549 = vunpack.c.l.b16 %v353
        %v550 = vunpack.c.l.b16 %v354
        %v551 = vunpack.c.l.b16 %v355
        %v552 = vunpack.c.l.b16 %v356
        %v553 = vunpack.c.l.b16 %v357
        %v554 = vunpack.c.l.b16 %v358
        %v555 = vunpack.c.l.b16 %v359
        %v556 = vunpack.c.l.b16 %v360
        %v557 = vunpack.c.l.b16 %v361
        %v558 = vunpack.c.l.b16 %v362
        %v559 = vunpack.c.l.b16 %v363
        %v560 = vunpack.c.l.b16 %v364
        %v561 = vunpack.c.l.b16 %v365
        %v562 = vunpack.c.l.b16 %v366
        %v563 = vunpack.c.l.b16 %v367
        %v564 = vunpack.c.l.b16 %v368
        %v565 = vunpack.c.l.b16 %v369
        %v566 = vunpack.c.l.b16 %v370
        %v567 = vunpack.c.l.b16 %v371
        %v568 = vunpack.c.l.b16 %v372
        %v569 = vunpack.c.l.b16 %v373
        %v570 = vunpack.c.l.b16 %v374
        %v571 = vunpack.c.l.b16 %v375
        %v572 = vunpack.c.l.b16 %v376
        %v573 = vunpack.c.l.b16 %v377
        %v574 = vunpack.c.l.b16 %v378
        %v575 = vunpack.c.l.b16 %v379
        %v576 = vunpack.c.l.b16 %v380
        %v577 = vunpack.c.l.b16 %v381
        %v578 = vunpack.c.l.b16 %v382
        %v579 = vunpack.c.l.b16 %v383
        %v580 = vpack.c.b16 %v517, %v516
        %v581 = vpack.c.b16 %v519, %v518
        %v582 = vpack.c.b16 %v521, %v520
        %v583 = vpack.c.b16 %v523, %v522
        %v584 = vpack.c.b16 %v525, %v524
        %v585 = vpack.c.b16 %v527, %v526
        %v586 = vpack.c.b16 %v529, %v528
        %v587 = vpack.c.b16 %v531, %v530
        %v588 = vpack.c.b16 %v533, %v532
        %v589 = vpack.c.b16 %v535, %v534
        %v590 = vpack.c.b16 %v537, %v536
        %v591 = vpack.c.b16 %v539, %v538
        %v592 = vpack.c.b16 %v541, %v540
        %v593 = vpack.c.b16 %v543, %v542
        %v594 = vpack.c.b16 %v545, %v544
        %v595 = vpack.c.b16 %v547, %v546
        %v596 = vpack.c.b16 %v549, %v548
        %v597 = vpack.c.b16 %v551, %v550
        %v598 = vpack.c.b16 %v553, %v552
        %v599 = vpack.c.b16 %v555, %v554
        %v600 = vpack.c.b16 %v557, %v556
        %v601 = vpack.c.b16 %v559, %v558
        %v602 = vpack.c.b16 %v561, %v560
        %v603 = vpack.c.b16 %v563, %v562
        %v604 = vpack.c.b16 %v565, %v564
        %v605 = vpack.c.b16 %v567, %v566
        %v606 = vpack.c.b16 %v569, %v568
        %v607 = vpack.c.b16 %v571, %v570
        %v608 = vpack.c.b16 %v573, %v572
        %v609 = vpack.c.b16 %v575, %v574
        %v610 = vpack.c.b16 %v577, %v576
        %v611 = vpack.c.b16 %v579, %v578
        %v616 = vunpack.c.l.b16 %v448
        %v617 = vunpack.c.l.b16 %v449
        %v618 = vunpack.c.l.b16 %v450
        %v619 = vunpack.c.l.b16 %v451
        %v620 = vpack.c.b16 %v617, %v616
        %v621 = vpack.c.b16 %v619, %v618
        %vm623 = vcmask 220160
        %v625 = vsel %vm623, %v580, 0
        %v628 = vsel %vm623, %v581, 0
        %v631 = vsel %vm623, %v582, 0
        %v634 = vsel %vm623, %v583, 0
        %v637 = vsel %vm623, %v584, 0
        %v640 = vsel %vm623, %v585, 0
        %v643 = vsel %vm623, %v586, 0
        %v646 = vsel %vm623, %v587, 0
        %v649 = vsel %vm623, %v588, 0
        %v652 = vsel %vm623, %v589, 0
        %v655 = vsel %vm623, %v590, 0
        %v658 = vsel %vm623, %v591, 0
        %v661 = vsel %vm623, %v592, 0
        %v664 = vsel %vm623, %v593, 0
        %v667 = vsel %vm623, %v594, 0
        %v670 = vsel %vm623, %v595, 0
        %v673 = vsel %vm623, %v596, 0
        %v676 = vsel %vm623, %v597, 0
        %v679 = vsel %vm623, %v598, 0
        %v682 = vsel %vm623, %v599, 0
        %v685 = vsel %vm623, %v600, 0
        %v688 = vsel %vm623, %v601, 0
        %v691 = vsel %vm623, %v602, 0
        %v694 = vsel %vm623, %v603, 0
        %v697 = vsel %vm623, %v604, 0
        %v700 = vsel %vm623, %v605, 0
        %v703 = vsel %vm623, %v606, 0
        %v706 = vsel %vm623, %v607, 0
        %v709 = vsel %vm623, %v608, 0
        %v712 = vsel %vm623, %v609, 0
        %v715 = vsel %vm623, %v610, 0
        %v718 = vsel %vm623, %v611, 0
        %vm720 = vcmask 1044480
        %vm721 = vcmask 1045504
        %v722 = vsel %vm720, 4294967295, 65535
        %v723 = vsel %vm721, %v722, 0
        %v725 = vand.u32 %v621, %v723
        %727 = vmatprep.subr.bf16.mxu0 0
        %728 = vmatpush1.bf16.msra.mxu0 %v620
        %729 = vmatprep.subr.bf16.mxu0 0
        %730 = vmatpush1.bf16.msra.mxu0 %v725
        %731 = vmatprep.subr.bf16.mxu0 0
        %732 = vmatpush1.bf16.msra.mxu0 0
        %733 = vmatprep.subr.bf16.mxu0 0
        %734 = vmatpush1.bf16.msra.mxu0 0
        %735 = vmatprep.subr.bf16.mxu0 0
        %736 = vmatpush1.bf16.msra.mxu0 0
        %737 = vmatprep.subr.bf16.mxu0 0
        %738 = vmatpush1.bf16.msra.mxu0 0
        %739 = vmatprep.subr.bf16.mxu0 0
        %740 = vmatpush1.bf16.msra.mxu0 0
        %741 = vmatprep.subr.bf16.mxu0 0
        %742 = vmatpush1.bf16.msra.mxu0 0
        %743 = vmatprep.subr.bf16.mxu0 0
        %744 = vmatpush1.bf16.msra.mxu0 0
        %745 = vmatprep.subr.bf16.mxu0 0
        %746 = vmatpush1.bf16.msra.mxu0 0
        %747 = vmatprep.subr.bf16.mxu0 0
        %748 = vmatpush1.bf16.msra.mxu0 0
        %749 = vmatprep.subr.bf16.mxu0 0
        %750 = vmatpush1.bf16.msra.mxu0 0
        %751 = vmatprep.subr.bf16.mxu0 0
        %752 = vmatpush1.bf16.msra.mxu0 0
        %753 = vmatprep.subr.bf16.mxu0 0
        %754 = vmatpush1.bf16.msra.mxu0 0
        %755 = vmatprep.subr.bf16.mxu0 0
        %756 = vmatpush1.bf16.msra.mxu0 0
        %757 = vmatprep.subr.bf16.mxu0 0
        %758 = vmatpush1.bf16.msra.mxu0 0
        %759 = vmatprep.mubr.bf16.mxu0 0
        %760 = vmatmul.mubr.bf16.gmra.mrb[0].mxu0 %v625
        %v761 = vpop.f32.mrb[0].mxu0
        %v762 = vadd.f32 0.0, %v761
        %v763 = vpop.f32.mrb[0].mxu0
        %v764 = vpop.f32.mrb[0].mxu0
        %v765 = vadd.f32 0.0, %v764
        %v766 = vpop.f32.mrb[0].mxu0
        %767 = vmatprep.mubr.bf16.mxu0 0
        %768 = vmatmul.mubr.bf16.gmra.mrb[0].mxu0 %v628
        %v769 = vpop.f32.mrb[0].mxu0
        %v770 = vadd.f32 0.0, %v769
        %v771 = vpop.f32.mrb[0].mxu0
        %v772 = vpop.f32.mrb[0].mxu0
        %v773 = vadd.f32 0.0, %v772
        %v774 = vpop.f32.mrb[0].mxu0
        %775 = vmatprep.mubr.bf16.mxu0 0
        %776 = vmatmul.mubr.bf16.gmra.mrb[0].mxu0 %v631
        %v777 = vpop.f32.mrb[0].mxu0
        %v778 = vadd.f32 0.0, %v777
        %v779 = vpop.f32.mrb[0].mxu0
        %v780 = vpop.f32.mrb[0].mxu0
        %v781 = vadd.f32 0.0, %v780
        %v782 = vpop.f32.mrb[0].mxu0
        %783 = vmatprep.mubr.bf16.mxu0 0
        %784 = vmatmul.mubr.bf16.gmra.mrb[0].mxu0 %v634
        %v785 = vpop.f32.mrb[0].mxu0
        %v786 = vadd.f32 0.0, %v785
        %v787 = vpop.f32.mrb[0].mxu0
        %v788 = vpop.f32.mrb[0].mxu0
        %v789 = vadd.f32 0.0, %v788
        %v790 = vpop.f32.mrb[0].mxu0
        %791 = vmatprep.mubr.bf16.mxu0 0
        %792 = vmatmul.mubr.bf16.gmra.mrb[0].mxu0 %v637
        %v793 = vpop.f32.mrb[0].mxu0
        %v794 = vadd.f32 0.0, %v793
        %v795 = vpop.f32.mrb[0].mxu0
        %v796 = vpop.f32.mrb[0].mxu0
        %v797 = vadd.f32 0.0, %v796
        %v798 = vpop.f32.mrb[0].mxu0
        %799 = vmatprep.mubr.bf16.mxu0 0
        %800 = vmatmul.mubr.bf16.gmra.mrb[0].mxu0 %v640
        %v801 = vpop.f32.mrb[0].mxu0
        %v802 = vadd.f32 0.0, %v801
        %v803 = vpop.f32.mrb[0].mxu0
        %v804 = vpop.f32.mrb[0].mxu0
        %v805 = vadd.f32 0.0, %v804
        %v806 = vpop.f32.mrb[0].mxu0
        %807 = vmatprep.mubr.bf16.mxu0 0
        %808 = vmatmul.mubr.bf16.gmra.mrb[0].mxu0 %v643
        %v809 = vpop.f32.mrb[0].mxu0
        %v810 = vadd.f32 0.0, %v809
        %v811 = vpop.f32.mrb[0].mxu0
        %v812 = vpop.f32.mrb[0].mxu0
        %v813 = vadd.f32 0.0, %v812
        %v814 = vpop.f32.mrb[0].mxu0
        %815 = vmatprep.mubr.bf16.mxu0 0
        %816 = vmatmul.mubr.bf16.gmra.mrb[0].mxu0 %v646
        %v817 = vpop.f32.mrb[0].mxu0
        %v818 = vadd.f32 0.0, %v817
        %v819 = vpop.f32.mrb[0].mxu0
        %v820 = vpop.f32.mrb[0].mxu0
        %v821 = vadd.f32 0.0, %v820
        %v822 = vpop.f32.mrb[0].mxu0
        %823 = vmatprep.mubr.bf16.mxu0 0
        %824 = vmatmul.mubr.bf16.gmra.mrb[0].mxu0 %v649
        %v825 = vpop.f32.mrb[0].mxu0
        %v826 = vadd.f32 0.0, %v825
        %v827 = vpop.f32.mrb[0].mxu0
        %v828 = vpop.f32.mrb[0].mxu0
        %v829 = vadd.f32 0.0, %v828
        %v830 = vpop.f32.mrb[0].mxu0
        %831 = vmatprep.mubr.bf16.mxu0 0
        %832 = vmatmul.mubr.bf16.gmra.mrb[0].mxu0 %v652
        %v833 = vpop.f32.mrb[0].mxu0
        %v834 = vadd.f32 0.0, %v833
        %v835 = vpop.f32.mrb[0].mxu0
        %v836 = vpop.f32.mrb[0].mxu0
        %v837 = vadd.f32 0.0, %v836
        %v838 = vpop.f32.mrb[0].mxu0
        %839 = vmatprep.mubr.bf16.mxu0 0
        %840 = vmatmul.mubr.bf16.gmra.mrb[0].mxu0 %v655
        %v841 = vpop.f32.mrb[0].mxu0
        %v842 = vadd.f32 0.0, %v841
        %v843 = vpop.f32.mrb[0].mxu0
        %v844 = vpop.f32.mrb[0].mxu0
        %v845 = vadd.f32 0.0, %v844
        %v846 = vpop.f32.mrb[0].mxu0
        %847 = vmatprep.mubr.bf16.mxu0 0
        %848 = vmatmul.mubr.bf16.gmra.mrb[0].mxu0 %v658
        %v849 = vpop.f32.mrb[0].mxu0
        %v850 = vadd.f32 0.0, %v849
        %v851 = vpop.f32.mrb[0].mxu0
        %v852 = vpop.f32.mrb[0].mxu0
        %v853 = vadd.f32 0.0, %v852
        %v854 = vpop.f32.mrb[0].mxu0
        %855 = vmatprep.mubr.bf16.mxu0 0
        %856 = vmatmul.mubr.bf16.gmra.mrb[0].mxu0 %v661
        %v857 = vpop.f32.mrb[0].mxu0
        %v858 = vadd.f32 0.0, %v857
        %v859 = vpop.f32.mrb[0].mxu0
        %v860 = vpop.f32.mrb[0].mxu0
        %v861 = vadd.f32 0.0, %v860
        %v862 = vpop.f32.mrb[0].mxu0
        %863 = vmatprep.mubr.bf16.mxu0 0
        %864 = vmatmul.mubr.bf16.gmra.mrb[0].mxu0 %v664
        %v865 = vpop.f32.mrb[0].mxu0
        %v866 = vadd.f32 0.0, %v865
        %v867 = vpop.f32.mrb[0].mxu0
        %v868 = vpop.f32.mrb[0].mxu0
        %v869 = vadd.f32 0.0, %v868
        %v870 = vpop.f32.mrb[0].mxu0
        %871 = vmatprep.mubr.bf16.mxu0 0
        %872 = vmatmul.mubr.bf16.gmra.mrb[0].mxu0 %v667
        %v873 = vpop.f32.mrb[0].mxu0
        %v874 = vadd.f32 0.0, %v873
        %v875 = vpop.f32.mrb[0].mxu0
        %v876 = vpop.f32.mrb[0].mxu0
        %v877 = vadd.f32 0.0, %v876
        %v878 = vpop.f32.mrb[0].mxu0
        %879 = vmatprep.mubr.bf16.mxu0 0
        %880 = vmatmul.mubr.bf16.gmra.mrb[0].mxu0 %v670
        %v881 = vpop.f32.mrb[0].mxu0
        %v882 = vadd.f32 0.0, %v881
        %v883 = vpop.f32.mrb[0].mxu0
        %v884 = vpop.f32.mrb[0].mxu0
        %v885 = vadd.f32 0.0, %v884
        %v886 = vpop.f32.mrb[0].mxu0
        %887 = vmatprep.mubr.bf16.mxu0 0
        %888 = vmatmul.mubr.bf16.gmra.mrb[0].mxu0 %v673
        %v889 = vpop.f32.mrb[0].mxu0
        %v890 = vadd.f32 0.0, %v889
        %v891 = vpop.f32.mrb[0].mxu0
        %v892 = vpop.f32.mrb[0].mxu0
        %v893 = vadd.f32 0.0, %v892
        %v894 = vpop.f32.mrb[0].mxu0
        %895 = vmatprep.mubr.bf16.mxu0 0
        %896 = vmatmul.mubr.bf16.gmra.mrb[0].mxu0 %v676
        %v897 = vpop.f32.mrb[0].mxu0
        %v898 = vadd.f32 0.0, %v897
        %v899 = vpop.f32.mrb[0].mxu0
        %v900 = vpop.f32.mrb[0].mxu0
        %v901 = vadd.f32 0.0, %v900
        %v902 = vpop.f32.mrb[0].mxu0
        %903 = vmatprep.mubr.bf16.mxu0 0
        %904 = vmatmul.mubr.bf16.gmra.mrb[0].mxu0 %v679
        %v905 = vpop.f32.mrb[0].mxu0
        %v906 = vadd.f32 0.0, %v905
        %v907 = vpop.f32.mrb[0].mxu0
        %v908 = vpop.f32.mrb[0].mxu0
        %v909 = vadd.f32 0.0, %v908
        %v910 = vpop.f32.mrb[0].mxu0
        %911 = vmatprep.mubr.bf16.mxu0 0
        %912 = vmatmul.mubr.bf16.gmra.mrb[0].mxu0 %v682
        %v913 = vpop.f32.mrb[0].mxu0
        %v914 = vadd.f32 0.0, %v913
        %v915 = vpop.f32.mrb[0].mxu0
        %v916 = vpop.f32.mrb[0].mxu0
        %v917 = vadd.f32 0.0, %v916
        %v918 = vpop.f32.mrb[0].mxu0
        %919 = vmatprep.mubr.bf16.mxu0 0
        %920 = vmatmul.mubr.bf16.gmra.mrb[0].mxu0 %v685
        %v921 = vpop.f32.mrb[0].mxu0
        %v922 = vadd.f32 0.0, %v921
        %v923 = vpop.f32.mrb[0].mxu0
        %v924 = vpop.f32.mrb[0].mxu0
        %v925 = vadd.f32 0.0, %v924
        %v926 = vpop.f32.mrb[0].mxu0
        %927 = vmatprep.mubr.bf16.mxu0 0
        %928 = vmatmul.mubr.bf16.gmra.mrb[0].mxu0 %v688
        %v929 = vpop.f32.mrb[0].mxu0
        %v930 = vadd.f32 0.0, %v929
        %v931 = vpop.f32.mrb[0].mxu0
        %v932 = vpop.f32.mrb[0].mxu0
        %v933 = vadd.f32 0.0, %v932
        %v934 = vpop.f32.mrb[0].mxu0
        %935 = vmatprep.mubr.bf16.mxu0 0
        %936 = vmatmul.mubr.bf16.gmra.mrb[0].mxu0 %v691
        %v937 = vpop.f32.mrb[0].mxu0
        %v938 = vadd.f32 0.0, %v937
        %v939 = vpop.f32.mrb[0].mxu0
        %v940 = vpop.f32.mrb[0].mxu0
        %v941 = vadd.f32 0.0, %v940
        %v942 = vpop.f32.mrb[0].mxu0
        %943 = vmatprep.mubr.bf16.mxu0 0
        %944 = vmatmul.mubr.bf16.gmra.mrb[0].mxu0 %v694
        %v945 = vpop.f32.mrb[0].mxu0
        %v946 = vadd.f32 0.0, %v945
        %v947 = vpop.f32.mrb[0].mxu0
        %v948 = vpop.f32.mrb[0].mxu0
        %v949 = vadd.f32 0.0, %v948
        %v950 = vpop.f32.mrb[0].mxu0
        %951 = vmatprep.mubr.bf16.mxu0 0
        %952 = vmatmul.mubr.bf16.gmra.mrb[0].mxu0 %v697
        %v953 = vpop.f32.mrb[0].mxu0
        %v954 = vadd.f32 0.0, %v953
        %v955 = vpop.f32.mrb[0].mxu0
        %v956 = vpop.f32.mrb[0].mxu0
        %v957 = vadd.f32 0.0, %v956
        %v958 = vpop.f32.mrb[0].mxu0
        %959 = vmatprep.mubr.bf16.mxu0 0
        %960 = vmatmul.mubr.bf16.gmra.mrb[0].mxu0 %v700
        %v961 = vpop.f32.mrb[0].mxu0
        %v962 = vadd.f32 0.0, %v961
        %v963 = vpop.f32.mrb[0].mxu0
        %v964 = vpop.f32.mrb[0].mxu0
        %v965 = vadd.f32 0.0, %v964
        %v966 = vpop.f32.mrb[0].mxu0
        %967 = vmatprep.mubr.bf16.mxu0 0
        %968 = vmatmul.mubr.bf16.gmra.mrb[0].mxu0 %v703
        %v969 = vpop.f32.mrb[0].mxu0
        %v970 = vadd.f32 0.0, %v969
        %v971 = vpop.f32.mrb[0].mxu0
        %v972 = vpop.f32.mrb[0].mxu0
        %v973 = vadd.f32 0.0, %v972
        %v974 = vpop.f32.mrb[0].mxu0
        %975 = vmatprep.mubr.bf16.mxu0 0
        %976 = vmatmul.mubr.bf16.gmra.mrb[0].mxu0 %v706
        %v977 = vpop.f32.mrb[0].mxu0
        %v978 = vadd.f32 0.0, %v977
        %v979 = vpop.f32.mrb[0].mxu0
        %v980 = vpop.f32.mrb[0].mxu0
        %v981 = vadd.f32 0.0, %v980
        %v982 = vpop.f32.mrb[0].mxu0
        %983 = vmatprep.mubr.bf16.mxu0 0
        %984 = vmatmul.mubr.bf16.gmra.mrb[0].mxu0 %v709
        %v985 = vpop.f32.mrb[0].mxu0
        %v986 = vadd.f32 0.0, %v985
        %v987 = vpop.f32.mrb[0].mxu0
        %v988 = vpop.f32.mrb[0].mxu0
        %v989 = vadd.f32 0.0, %v988
        %v990 = vpop.f32.mrb[0].mxu0
        %991 = vmatprep.mubr.bf16.mxu0 0
        %992 = vmatmul.mubr.bf16.gmra.mrb[0].mxu0 %v712
        %v993 = vpop.f32.mrb[0].mxu0
        %v994 = vadd.f32 0.0, %v993
        %v995 = vpop.f32.mrb[0].mxu0
        %v996 = vpop.f32.mrb[0].mxu0
        %v997 = vadd.f32 0.0, %v996
        %v998 = vpop.f32.mrb[0].mxu0
        %999 = vmatprep.mubr.bf16.mxu0 0
        %1000 = vmatmul.mubr.bf16.gmra.mrb[0].mxu0 %v715
        %v1001 = vpop.f32.mrb[0].mxu0
        %v1002 = vadd.f32 0.0, %v1001
        %v1003 = vpop.f32.mrb[0].mxu0
        %v1004 = vpop.f32.mrb[0].mxu0
        %v1005 = vadd.f32 0.0, %v1004
        %v1006 = vpop.f32.mrb[0].mxu0
        %1007 = vmatprep.mubr.bf16.mxu0 0
        %1008 = vmatmul.mubr.bf16.gmra.mrb[0].mxu0 %v718
        %v1009 = vpop.f32.mrb[0].mxu0
        %v1010 = vadd.f32 0.0, %v1009
        %v1011 = vpop.f32.mrb[0].mxu0
        %v1012 = vpop.f32.mrb[0].mxu0
        %v1013 = vadd.f32 0.0, %v1012
        %v1014 = vpop.f32.mrb[0].mxu0
        %1015 = vdwg.mxu0
        %v1016 = vadd.f32 %v384, %v762
        %v1017 = vadd.f32 %v385, %v765
        %v1018 = vadd.f32 %v386, %v770
        %v1019 = vadd.f32 %v387, %v773
        %v1020 = vadd.f32 %v388, %v778
        %v1021 = vadd.f32 %v389, %v781
        %v1022 = vadd.f32 %v390, %v786
        %v1023 = vadd.f32 %v391, %v789
        %v1024 = vadd.f32 %v392, %v794
        %v1025 = vadd.f32 %v393, %v797
        %v1026 = vadd.f32 %v394, %v802
        %v1027 = vadd.f32 %v395, %v805
        %v1028 = vadd.f32 %v396, %v810
        %v1029 = vadd.f32 %v397, %v813
        %v1030 = vadd.f32 %v398, %v818
        %v1031 = vadd.f32 %v399, %v821
        %v1032 = vadd.f32 %v400, %v826
        %v1033 = vadd.f32 %v401, %v829
        %v1034 = vadd.f32 %v402, %v834
        %v1035 = vadd.f32 %v403, %v837
        %v1036 = vadd.f32 %v404, %v842
        %v1037 = vadd.f32 %v405, %v845
        %v1038 = vadd.f32 %v406, %v850
        %v1039 = vadd.f32 %v407, %v853
        %v1040 = vadd.f32 %v408, %v858
        %v1041 = vadd.f32 %v409, %v861
        %v1042 = vadd.f32 %v410, %v866
        %v1043 = vadd.f32 %v411, %v869
        %v1044 = vadd.f32 %v412, %v874
        %v1045 = vadd.f32 %v413, %v877
        %v1046 = vadd.f32 %v414, %v882
        %v1047 = vadd.f32 %v415, %v885
        %v1048 = vadd.f32 %v416, %v890
        %v1049 = vadd.f32 %v417, %v893
        %v1050 = vadd.f32 %v418, %v898
        %v1051 = vadd.f32 %v419, %v901
        %v1052 = vadd.f32 %v420, %v906
        %v1053 = vadd.f32 %v421, %v909
        %v1054 = vadd.f32 %v422, %v914
        %v1055 = vadd.f32 %v423, %v917
        %v1056 = vadd.f32 %v424, %v922
        %v1057 = vadd.f32 %v425, %v925
        %v1058 = vadd.f32 %v426, %v930
        %v1059 = vadd.f32 %v427, %v933
        %v1060 = vadd.f32 %v428, %v938
        %v1061 = vadd.f32 %v429, %v941
        %v1062 = vadd.f32 %v430, %v946
        %v1063 = vadd.f32 %v431, %v949
        %v1064 = vadd.f32 %v432, %v954
        %v1065 = vadd.f32 %v433, %v957
        %v1066 = vadd.f32 %v434, %v962
        %v1067 = vadd.f32 %v435, %v965
        %v1068 = vadd.f32 %v436, %v970
        %v1069 = vadd.f32 %v437, %v973
        %v1070 = vadd.f32 %v438, %v978
        %v1071 = vadd.f32 %v439, %v981
        %v1072 = vadd.f32 %v440, %v986
        %v1073 = vadd.f32 %v441, %v989
        %v1074 = vadd.f32 %v442, %v994
        %v1075 = vadd.f32 %v443, %v997
        %v1076 = vadd.f32 %v444, %v1002
        %v1077 = vadd.f32 %v445, %v1005
        %v1078 = vadd.f32 %v446, %v1010
        %v1079 = vadd.f32 %v447, %v1013
        %1080 = vst [vmem:[#allocation2] sm:$0xff] %v1016
        %1081 = vst [vmem:[#allocation2 + $0x8] sm:$0xff] %v1017
        %1082 = vst [vmem:[#allocation2 + $0x10] sm:$0xff] %v1018
        %1083 = vst [vmem:[#allocation2 + $0x18] sm:$0xff] %v1019
        %1084 = vst [vmem:[#allocation2 + $0x20] sm:$0xff] %v1020
        %1085 = vst [vmem:[#allocation2 + $0x28] sm:$0xff] %v1021
        %1086 = vst [vmem:[#allocation2 + $0x30] sm:$0xff] %v1022
        %1087 = vst [vmem:[#allocation2 + $0x38] sm:$0xff] %v1023
        %1088 = vst [vmem:[#allocation2 + $0x40] sm:$0xff] %v1024
        %1089 = vst [vmem:[#allocation2 + $0x48] sm:$0xff] %v1025
        %1090 = vst [vmem:[#allocation2 + $0x50] sm:$0xff] %v1026
        %1091 = vst [vmem:[#allocation2 + $0x58] sm:$0xff] %v1027
        %1092 = vst [vmem:[#allocation2 + $0x60] sm:$0xff] %v1028
        %1093 = vst [vmem:[#allocation2 + $0x68] sm:$0xff] %v1029
        %1094 = vst [vmem:[#allocation2 + $0x70] sm:$0xff] %v1030
        %1095 = vst [vmem:[#allocation2 + $0x78] sm:$0xff] %v1031
        %1096 = vst [vmem:[#allocation2 + $0x80] sm:$0xff] %v1032
        %1097 = vst [vmem:[#allocation2 + $0x88] sm:$0xff] %v1033
        %1098 = vst [vmem:[#allocation2 + $0x90] sm:$0xff] %v1034
        %1099 = vst [vmem:[#allocation2 + $0x98] sm:$0xff] %v1035
        %1100 = vst [vmem:[#allocation2 + $0xa0] sm:$0xff] %v1036
        %1101 = vst [vmem:[#allocation2 + $0xa8] sm:$0xff] %v1037
        %1102 = vst [vmem:[#allocation2 + $0xb0] sm:$0xff] %v1038
        %1103 = vst [vmem:[#allocation2 + $0xb8] sm:$0xff] %v1039
        %1104 = vst [vmem:[#allocation2 + $0xc0] sm:$0xff] %v1040
        %1105 = vst [vmem:[#allocation2 + $0xc8] sm:$0xff] %v1041
        %1106 = vst [vmem:[#allocation2 + $0xd0] sm:$0xff] %v1042
        %1107 = vst [vmem:[#allocation2 + $0xd8] sm:$0xff] %v1043
        %1108 = vst [vmem:[#allocation2 + $0xe0] sm:$0xff] %v1044
        %1109 = vst [vmem:[#allocation2 + $0xe8] sm:$0xff] %v1045
        %1110 = vst [vmem:[#allocation2 + $0xf0] sm:$0xff] %v1046
        %1111 = vst [vmem:[#allocation2 + $0xf8] sm:$0xff] %v1047
        %1112 = vst [vmem:[#allocation2 + $0x100] sm:$0xff] %v1048
        %1113 = vst [vmem:[#allocation2 + $0x108] sm:$0xff] %v1049
        %1114 = vst [vmem:[#allocation2 + $0x110] sm:$0xff] %v1050
        %1115 = vst [vmem:[#allocation2 + $0x118] sm:$0xff] %v1051
        %1116 = vst [vmem:[#allocation2 + $0x120] sm:$0xff] %v1052
        %1117 = vst [vmem:[#allocation2 + $0x128] sm:$0xff] %v1053
        %1118 = vst [vmem:[#allocation2 + $0x130] sm:$0xff] %v1054
        %1119 = vst [vmem:[#allocation2 + $0x138] sm:$0xff] %v1055
        %1120 = vst [vmem:[#allocation2 + $0x140] sm:$0xff] %v1056
        %1121 = vst [vmem:[#allocation2 + $0x148] sm:$0xff] %v1057
        %1122 = vst [vmem:[#allocation2 + $0x150] sm:$0xff] %v1058
        %1123 = vst [vmem:[#allocation2 + $0x158] sm:$0xff] %v1059
        %1124 = vst [vmem:[#allocation2 + $0x160] sm:$0xff] %v1060
        %1125 = vst [vmem:[#allocation2 + $0x168] sm:$0xff] %v1061
        %1126 = vst [vmem:[#allocation2 + $0x170] sm:$0xff] %v1062
        %1127 = vst [vmem:[#allocation2 + $0x178] sm:$0xff] %v1063
        %1128 = vst [vmem:[#allocation2 + $0x180] sm:$0xff] %v1064
        %1129 = vst [vmem:[#allocation2 + $0x188] sm:$0xff] %v1065
        %1130 = vst [vmem:[#allocation2 + $0x190] sm:$0xff] %v1066
        %1131 = vst [vmem:[#allocation2 + $0x198] sm:$0xff] %v1067
        %1132 = vst [vmem:[#allocation2 + $0x1a0] sm:$0xff] %v1068
        %1133 = vst [vmem:[#allocation2 + $0x1a8] sm:$0xff] %v1069
        %1134 = vst [vmem:[#allocation2 + $0x1b0] sm:$0xff] %v1070
        %1135 = vst [vmem:[#allocation2 + $0x1b8] sm:$0xff] %v1071
        %1136 = vst [vmem:[#allocation2 + $0x1c0] sm:$0xff] %v1072
        %1137 = vst [vmem:[#allocation2 + $0x1c8] sm:$0xff] %v1073
        %1138 = vst [vmem:[#allocation2 + $0x1d0] sm:$0xff] %v1074
        %1139 = vst [vmem:[#allocation2 + $0x1d8] sm:$0xff] %v1075
        %1140 = vst [vmem:[#allocation2 + $0x1e0] sm:$0xff] %v1076
        %1141 = vst [vmem:[#allocation2 + $0x1e8] sm:$0xff] %v1077
        %1142 = vst [vmem:[#allocation2 + $0x1f0] sm:$0xff] %v1078
        %1143 = vst [vmem:[#allocation2 + $0x1f8] sm:$0xff] %v1079
        // Predicated region
        $region37: #{matmul_bias_act.1} parent=31 // pred_check
          %p1144 = pneg %p252
        $region38: #{matmul_bias_act.1} parent=31 // pred_check_branch
          %1146 = sbr.rel (%p1144) target = $region40
        $region39: #{matmul_bias_act.1} parent=31 // pred_region
          %v1147 = vld [vmem:[#allocation2] sm:$0xff]
          %v1148 = vld [vmem:[#allocation2 + $0x8] sm:$0xff]
          %v1149 = vld [vmem:[#allocation2 + $0x10] sm:$0xff]
          %v1150 = vld [vmem:[#allocation2 + $0x18] sm:$0xff]
          %v1151 = vld [vmem:[#allocation2 + $0x20] sm:$0xff]
          %v1152 = vld [vmem:[#allocation2 + $0x28] sm:$0xff]
          %v1153 = vld [vmem:[#allocation2 + $0x30] sm:$0xff]
          %v1154 = vld [vmem:[#allocation2 + $0x38] sm:$0xff]
          %v1155 = vld [vmem:[#allocation2 + $0x40] sm:$0xff]
          %v1156 = vld [vmem:[#allocation2 + $0x48] sm:$0xff]
          %v1157 = vld [vmem:[#allocation2 + $0x50] sm:$0xff]
          %v1158 = vld [vmem:[#allocation2 + $0x58] sm:$0xff]
          %v1159 = vld [vmem:[#allocation2 + $0x60] sm:$0xff]
          %v1160 = vld [vmem:[#allocation2 + $0x68] sm:$0xff]
          %v1161 = vld [vmem:[#allocation2 + $0x70] sm:$0xff]
          %v1162 = vld [vmem:[#allocation2 + $0x78] sm:$0xff]
          %v1163 = vld [vmem:[#allocation2 + $0x80] sm:$0xff]
          %v1164 = vld [vmem:[#allocation2 + $0x88] sm:$0xff]
          %v1165 = vld [vmem:[#allocation2 + $0x90] sm:$0xff]
          %v1166 = vld [vmem:[#allocation2 + $0x98] sm:$0xff]
          %v1167 = vld [vmem:[#allocation2 + $0xa0] sm:$0xff]
          %v1168 = vld [vmem:[#allocation2 + $0xa8] sm:$0xff]
          %v1169 = vld [vmem:[#allocation2 + $0xb0] sm:$0xff]
          %v1170 = vld [vmem:[#allocation2 + $0xb8] sm:$0xff]
          %v1171 = vld [vmem:[#allocation2 + $0xc0] sm:$0xff]
          %v1172 = vld [vmem:[#allocation2 + $0xc8] sm:$0xff]
          %v1173 = vld [vmem:[#allocation2 + $0xd0] sm:$0xff]
          %v1174 = vld [vmem:[#allocation2 + $0xd8] sm:$0xff]
          %v1175 = vld [vmem:[#allocation2 + $0xe0] sm:$0xff]
          %v1176 = vld [vmem:[#allocation2 + $0xe8] sm:$0xff]
          %v1177 = vld [vmem:[#allocation2 + $0xf0] sm:$0xff]
          %v1178 = vld [vmem:[#allocation2 + $0xf8] sm:$0xff]
          %v1179 = vld [vmem:[#allocation2 + $0x100] sm:$0xff]
          %v1180 = vld [vmem:[#allocation2 + $0x108] sm:$0xff]
          %v1181 = vld [vmem:[#allocation2 + $0x110] sm:$0xff]
          %v1182 = vld [vmem:[#allocation2 + $0x118] sm:$0xff]
          %v1183 = vld [vmem:[#allocation2 + $0x120] sm:$0xff]
          %v1184 = vld [vmem:[#allocation2 + $0x128] sm:$0xff]
          %v1185 = vld [vmem:[#allocation2 + $0x130] sm:$0xff]
          %v1186 = vld [vmem:[#allocation2 + $0x138] sm:$0xff]
          %v1187 = vld [vmem:[#allocation2 + $0x140] sm:$0xff]
          %v1188 = vld [vmem:[#allocation2 + $0x148] sm:$0xff]
          %v1189 = vld [vmem:[#allocation2 + $0x150] sm:$0xff]
          %v1190 = vld [vmem:[#allocation2 + $0x158] sm:$0xff]
          %v1191 = vld [vmem:[#allocation2 + $0x160] sm:$0xff]
          %v1192 = vld [vmem:[#allocation2 + $0x168] sm:$0xff]
          %v1193 = vld [vmem:[#allocation2 + $0x170] sm:$0xff]
          %v1194 = vld [vmem:[#allocation2 + $0x178] sm:$0xff]
          %v1195 = vld [vmem:[#allocation2 + $0x180] sm:$0xff]
          %v1196 = vld [vmem:[#allocation2 + $0x188] sm:$0xff]
          %v1197 = vld [vmem:[#allocation2 + $0x190] sm:$0xff]
          %v1198 = vld [vmem:[#allocation2 + $0x198] sm:$0xff]
          %v1199 = vld [vmem:[#allocation2 + $0x1a0] sm:$0xff]
          %v1200 = vld [vmem:[#allocation2 + $0x1a8] sm:$0xff]
          %v1201 = vld [vmem:[#allocation2 + $0x1b0] sm:$0xff]
          %v1202 = vld [vmem:[#allocation2 + $0x1b8] sm:$0xff]
          %v1203 = vld [vmem:[#allocation2 + $0x1c0] sm:$0xff]
          %v1204 = vld [vmem:[#allocation2 + $0x1c8] sm:$0xff]
          %v1205 = vld [vmem:[#allocation2 + $0x1d0] sm:$0xff]
          %v1206 = vld [vmem:[#allocation2 + $0x1d8] sm:$0xff]
          %v1207 = vld [vmem:[#allocation2 + $0x1e0] sm:$0xff]
          %v1208 = vld [vmem:[#allocation2 + $0x1e8] sm:$0xff]
          %v1209 = vld [vmem:[#allocation2 + $0x1f0] sm:$0xff]
          %v1210 = vld [vmem:[#allocation2 + $0x1f8] sm:$0xff]
          %v1211 = vld [vmem:[%s249] sm:$0x1]
          %v1213 = vlaneseq
          %v1214 = vshrl.u32 %v1213, 7
          %v1215 = vsub.s32 0, %v1214
          %v1216 = vrot.slane %v1211, %v1215
          %v1218 = vadd.f32 %v1147, %v1216
          %v1219 = vadd.f32 %v1148, %v1216
          %v1220 = vadd.f32 %v1149, %v1216
          %v1221 = vadd.f32 %v1150, %v1216
          %v1222 = vadd.f32 %v1151, %v1216
          %v1223 = vadd.f32 %v1152, %v1216
          %v1224 = vadd.f32 %v1153, %v1216
          %v1225 = vadd.f32 %v1154, %v1216
          %v1226 = vadd.f32 %v1155, %v1216
          %v1227 = vadd.f32 %v1156, %v1216
          %v1228 = vadd.f32 %v1157, %v1216
          %v1229 = vadd.f32 %v1158, %v1216
          %v1230 = vadd.f32 %v1159, %v1216
          %v1231 = vadd.f32 %v1160, %v1216
          %v1232 = vadd.f32 %v1161, %v1216
          %v1233 = vadd.f32 %v1162, %v1216
          %v1234 = vadd.f32 %v1163, %v1216
          %v1235 = vadd.f32 %v1164, %v1216
          %v1236 = vadd.f32 %v1165, %v1216
          %v1237 = vadd.f32 %v1166, %v1216
          %v1238 = vadd.f32 %v1167, %v1216
          %v1239 = vadd.f32 %v1168, %v1216
          %v1240 = vadd.f32 %v1169, %v1216
          %v1241 = vadd.f32 %v1170, %v1216
          %v1242 = vadd.f32 %v1171, %v1216
          %v1243 = vadd.f32 %v1172, %v1216
          %v1244 = vadd.f32 %v1173, %v1216
          %v1245 = vadd.f32 %v1174, %v1216
          %v1246 = vadd.f32 %v1175, %v1216
          %v1247 = vadd.f32 %v1176, %v1216
          %v1248 = vadd.f32 %v1177, %v1216
          %v1249 = vadd.f32 %v1178, %v1216
          %v1250 = vadd.f32 %v1179, %v1216
          %v1251 = vadd.f32 %v1180, %v1216
          %v1252 = vadd.f32 %v1181, %v1216
          %v1253 = vadd.f32 %v1182, %v1216
          %v1254 = vadd.f32 %v1183, %v1216
          %v1255 = vadd.f32 %v1184, %v1216
          %v1256 = vadd.f32 %v1185, %v1216
          %v1257 = vadd.f32 %v1186, %v1216
          %v1258 = vadd.f32 %v1187, %v1216
          %v1259 = vadd.f32 %v1188, %v1216
          %v1260 = vadd.f32 %v1189, %v1216
          %v1261 = vadd.f32 %v1190, %v1216
          %v1262 = vadd.f32 %v1191, %v1216
          %v1263 = vadd.f32 %v1192, %v1216
          %v1264 = vadd.f32 %v1193, %v1216
          %v1265 = vadd.f32 %v1194, %v1216
          %v1266 = vadd.f32 %v1195, %v1216
          %v1267 = vadd.f32 %v1196, %v1216
          %v1268 = vadd.f32 %v1197, %v1216
          %v1269 = vadd.f32 %v1198, %v1216
          %v1270 = vadd.f32 %v1199, %v1216
          %v1271 = vadd.f32 %v1200, %v1216
          %v1272 = vadd.f32 %v1201, %v1216
          %v1273 = vadd.f32 %v1202, %v1216
          %v1274 = vadd.f32 %v1203, %v1216
          %v1275 = vadd.f32 %v1204, %v1216
          %v1276 = vadd.f32 %v1205, %v1216
          %v1277 = vadd.f32 %v1206, %v1216
          %v1278 = vadd.f32 %v1207, %v1216
          %v1279 = vadd.f32 %v1208, %v1216
          %v1280 = vadd.f32 %v1209, %v1216
          %v1281 = vadd.f32 %v1210, %v1216
          %v1282 = vxor.u32 %v1218, 2147483648
          %v1283 = vxor.u32 %v1219, 2147483648
          %v1284 = vxor.u32 %v1220, 2147483648
          %v1285 = vxor.u32 %v1221, 2147483648
          %v1286 = vxor.u32 %v1222, 2147483648
          %v1287 = vxor.u32 %v1223, 2147483648
          %v1288 = vxor.u32 %v1224, 2147483648
          %v1289 = vxor.u32 %v1225, 2147483648
          %v1290 = vxor.u32 %v1226, 2147483648
          %v1291 = vxor.u32 %v1227, 2147483648
          %v1292 = vxor.u32 %v1228, 2147483648
          %v1293 = vxor.u32 %v1229, 2147483648
          %v1294 = vxor.u32 %v1230, 2147483648
          %v1295 = vxor.u32 %v1231, 2147483648
          %v1296 = vxor.u32 %v1232, 2147483648
          %v1297 = vxor.u32 %v1233, 2147483648
          %v1298 = vxor.u32 %v1234, 2147483648
          %v1299 = vxor.u32 %v1235, 2147483648
          %v1300 = vxor.u32 %v1236, 2147483648
          %v1301 = vxor.u32 %v1237, 2147483648
          %v1302 = vxor.u32 %v1238, 2147483648
          %v1303 = vxor.u32 %v1239, 2147483648
          %v1304 = vxor.u32 %v1240, 2147483648
          %v1305 = vxor.u32 %v1241, 2147483648
          %v1306 = vxor.u32 %v1242, 2147483648
          %v1307 = vxor.u32 %v1243, 2147483648
          %v1308 = vxor.u32 %v1244, 2147483648
          %v1309 = vxor.u32 %v1245, 2147483648
          %v1310 = vxor.u32 %v1246, 2147483648
          %v1311 = vxor.u32 %v1247, 2147483648
          %v1312 = vxor.u32 %v1248, 2147483648
          %v1313 = vxor.u32 %v1249, 2147483648
          %v1314 = vxor.u32 %v1250, 2147483648
          %v1315 = vxor.u32 %v1251, 2147483648
          %v1316 = vxor.u32 %v1252, 2147483648
          %v1317 = vxor.u32 %v1253, 2147483648
          %v1318 = vxor.u32 %v1254, 2147483648
          %v1319 = vxor.u32 %v1255, 2147483648
          %v1320 = vxor.u32 %v1256, 2147483648
          %v1321 = vxor.u32 %v1257, 2147483648
          %v1322 = vxor.u32 %v1258, 2147483648
          %v1323 = vxor.u32 %v1259, 2147483648
          %v1324 = vxor.u32 %v1260, 2147483648
          %v1325 = vxor.u32 %v1261, 2147483648
          %v1326 = vxor.u32 %v1262, 2147483648
          %v1327 = vxor.u32 %v1263, 2147483648
          %v1328 = vxor.u32 %v1264, 2147483648
          %v1329 = vxor.u32 %v1265, 2147483648
          %v1330 = vxor.u32 %v1266, 2147483648
          %v1331 = vxor.u32 %v1267, 2147483648
          %v1332 = vxor.u32 %v1268, 2147483648
          %v1333 = vxor.u32 %v1269, 2147483648
          %v1334 = vxor.u32 %v1270, 2147483648
          %v1335 = vxor.u32 %v1271, 2147483648
          %v1336 = vxor.u32 %v1272, 2147483648
          %v1337 = vxor.u32 %v1273, 2147483648
          %v1338 = vxor.u32 %v1274, 2147483648
          %v1339 = vxor.u32 %v1275, 2147483648
          %v1340 = vxor.u32 %v1276, 2147483648
          %v1341 = vxor.u32 %v1277, 2147483648
          %v1342 = vxor.u32 %v1278, 2147483648
          %v1343 = vxor.u32 %v1279, 2147483648
          %v1344 = vxor.u32 %v1280, 2147483648
          %v1345 = vxor.u32 %v1281, 2147483648
          %v1346 = vmul.f32 %v1282, 1.442695
          %v1347 = vpow.pop %v1346
          %v1348 = vmul.f32 %v1283, 1.442695
          %v1349 = vpow.pop %v1348
          %v1350 = vmul.f32 %v1284, 1.442695
          %v1351 = vpow.pop %v1350
          %v1352 = vmul.f32 %v1285, 1.442695
          %v1353 = vpow.pop %v1352
          %v1354 = vmul.f32 %v1286, 1.442695
          %v1355 = vpow.pop %v1354
          %v1356 = vmul.f32 %v1287, 1.442695
          %v1357 = vpow.pop %v1356
          %v1358 = vmul.f32 %v1288, 1.442695
          %v1359 = vpow.pop %v1358
          %v1360 = vmul.f32 %v1289, 1.442695
          %v1361 = vpow.pop %v1360
          %v1362 = vmul.f32 %v1290, 1.442695
          %v1363 = vpow.pop %v1362
          %v1364 = vmul.f32 %v1291, 1.442695
          %v1365 = vpow.pop %v1364
          %v1366 = vmul.f32 %v1292, 1.442695
          %v1367 = vpow.pop %v1366
          %v1368 = vmul.f32 %v1293, 1.442695
          %v1369 = vpow.pop %v1368
          %v1370 = vmul.f32 %v1294, 1.442695
          %v1371 = vpow.pop %v1370
          %v1372 = vmul.f32 %v1295, 1.442695
          %v1373 = vpow.pop %v1372
          %v1374 = vmul.f32 %v1296, 1.442695
          %v1375 = vpow.pop %v1374
          %v1376 = vmul.f32 %v1297, 1.442695
          %v1377 = vpow.pop %v1376
          %v1378 = vmul.f32 %v1298, 1.442695
          %v1379 = vpow.pop %v1378
          %v1380 = vmul.f32 %v1299, 1.442695
          %v1381 = vpow.pop %v1380
          %v1382 = vmul.f32 %v1300, 1.442695
          %v1383 = vpow.pop %v1382
          %v1384 = vmul.f32 %v1301, 1.442695
          %v1385 = vpow.pop %v1384
          %v1386 = vmul.f32 %v1302, 1.442695
          %v1387 = vpow.pop %v1386
          %v1388 = vmul.f32 %v1303, 1.442695
          %v1389 = vpow.pop %v1388
          %v1390 = vmul.f32 %v1304, 1.442695
          %v1391 = vpow.pop %v1390
          %v1392 = vmul.f32 %v1305, 1.442695
          %v1393 = vpow.pop %v1392
          %v1394 = vmul.f32 %v1306, 1.442695
          %v1395 = vpow.pop %v1394
          %v1396 = vmul.f32 %v1307, 1.442695
          %v1397 = vpow.pop %v1396
          %v1398 = vmul.f32 %v1308, 1.442695
          %v1399 = vpow.pop %v1398
          %v1400 = vmul.f32 %v1309, 1.442695
          %v1401 = vpow.pop %v1400
          %v1402 = vmul.f32 %v1310, 1.442695
          %v1403 = vpow.pop %v1402
          %v1404 = vmul.f32 %v1311, 1.442695
          %v1405 = vpow.pop %v1404
          %v1406 = vmul.f32 %v1312, 1.442695
          %v1407 = vpow.pop %v1406
          %v1408 = vmul.f32 %v1313, 1.442695
          %v1409 = vpow.pop %v1408
          %v1410 = vmul.f32 %v1314, 1.442695
          %v1411 = vpow.pop %v1410
          %v1412 = vmul.f32 %v1315, 1.442695
          %v1413 = vpow.pop %v1412
          %v1414 = vmul.f32 %v1316, 1.442695
          %v1415 = vpow.pop %v1414
          %v1416 = vmul.f32 %v1317, 1.442695
          %v1417 = vpow.pop %v1416
          %v1418 = vmul.f32 %v1318, 1.442695
          %v1419 = vpow.pop %v1418
          %v1420 = vmul.f32 %v1319, 1.442695
          %v1421 = vpow.pop %v1420
          %v1422 = vmul.f32 %v1320, 1.442695
          %v1423 = vpow.pop %v1422
          %v1424 = vmul.f32 %v1321, 1.442695
          %v1425 = vpow.pop %v1424
          %v1426 = vmul.f32 %v1322, 1.442695
          %v1427 = vpow.pop %v1426
          %v1428 = vmul.f32 %v1323, 1.442695
          %v1429 = vpow.pop %v1428
          %v1430 = vmul.f32 %v1324, 1.442695
          %v1431 = vpow.pop %v1430
          %v1432 = vmul.f32 %v1325, 1.442695
          %v1433 = vpow.pop %v1432
          %v1434 = vmul.f32 %v1326, 1.442695
          %v1435 = vpow.pop %v1434
          %v1436 = vmul.f32 %v1327, 1.442695
          %v1437 = vpow.pop %v1436
          %v1438 = vmul.f32 %v1328, 1.442695
          %v1439 = vpow.pop %v1438
          %v1440 = vmul.f32 %v1329, 1.442695
          %v1441 = vpow.pop %v1440
          %v1442 = vmul.f32 %v1330, 1.442695
          %v1443 = vpow.pop %v1442
          %v1444 = vmul.f32 %v1331, 1.442695
          %v1445 = vpow.pop %v1444
          %v1446 = vmul.f32 %v1332, 1.442695
          %v1447 = vpow.pop %v1446
          %v1448 = vmul.f32 %v1333, 1.442695
          %v1449 = vpow.pop %v1448
          %v1450 = vmul.f32 %v1334, 1.442695
          %v1451 = vpow.pop %v1450
          %v1452 = vmul.f32 %v1335, 1.442695
          %v1453 = vpow.pop %v1452
          %v1454 = vmul.f32 %v1336, 1.442695
          %v1455 = vpow.pop %v1454
          %v1456 = vmul.f32 %v1337, 1.442695
          %v1457 = vpow.pop %v1456
          %v1458 = vmul.f32 %v1338, 1.442695
          %v1459 = vpow.pop %v1458
          %v1460 = vmul.f32 %v1339, 1.442695
          %v1461 = vpow.pop %v1460
          %v1462 = vmul.f32 %v1340, 1.442695
          %v1463 = vpow.pop %v1462
          %v1464 = vmul.f32 %v1341, 1.442695
          %v1465 = vpow.pop %v1464
          %v1466 = vmul.f32 %v1342, 1.442695
          %v1467 = vpow.pop %v1466
          %v1468 = vmul.f32 %v1343, 1.442695
          %v1469 = vpow.pop %v1468
          %v1470 = vmul.f32 %v1344, 1.442695
          %v1471 = vpow.pop %v1470
          %v1472 = vmul.f32 %v1345, 1.442695
          %v1473 = vpow.pop %v1472
          %v1474 = vadd.f32 %v1347, 1.0
          %v1475 = vadd.f32 %v1349, 1.0
          %v1476 = vadd.f32 %v1351, 1.0
          %v1477 = vadd.f32 %v1353, 1.0
          %v1478 = vadd.f32 %v1355, 1.0
          %v1479 = vadd.f32 %v1357, 1.0
          %v1480 = vadd.f32 %v1359, 1.0
          %v1481 = vadd.f32 %v1361, 1.0
          %v1482 = vadd.f32 %v1363, 1.0
          %v1483 = vadd.f32 %v1365, 1.0
          %v1484 = vadd.f32 %v1367, 1.0
          %v1485 = vadd.f32 %v1369, 1.0
          %v1486 = vadd.f32 %v1371, 1.0
          %v1487 = vadd.f32 %v1373, 1.0
          %v1488 = vadd.f32 %v1375, 1.0
          %v1489 = vadd.f32 %v1377, 1.0
          %v1490 = vadd.f32 %v1379, 1.0
          %v1491 = vadd.f32 %v1381, 1.0
          %v1492 = vadd.f32 %v1383, 1.0
          %v1493 = vadd.f32 %v1385, 1.0
          %v1494 = vadd.f32 %v1387, 1.0
          %v1495 = vadd.f32 %v1389, 1.0
          %v1496 = vadd.f32 %v1391, 1.0
          %v1497 = vadd.f32 %v1393, 1.0
          %v1498 = vadd.f32 %v1395, 1.0
          %v1499 = vadd.f32 %v1397, 1.0
          %v1500 = vadd.f32 %v1399, 1.0
          %v1501 = vadd.f32 %v1401, 1.0
          %v1502 = vadd.f32 %v1403, 1.0
          %v1503 = vadd.f32 %v1405, 1.0
          %v1504 = vadd.f32 %v1407, 1.0
          %v1505 = vadd.f32 %v1409, 1.0
          %v1506 = vadd.f32 %v1411, 1.0
          %v1507 = vadd.f32 %v1413, 1.0
          %v1508 = vadd.f32 %v1415, 1.0
          %v1509 = vadd.f32 %v1417, 1.0
          %v1510 = vadd.f32 %v1419, 1.0
          %v1511 = vadd.f32 %v1421, 1.0
          %v1512 = vadd.f32 %v1423, 1.0
          %v1513 = vadd.f32 %v1425, 1.0
          %v1514 = vadd.f32 %v1427, 1.0
          %v1515 = vadd.f32 %v1429, 1.0
          %v1516 = vadd.f32 %v1431, 1.0
          %v1517 = vadd.f32 %v1433, 1.0
          %v1518 = vadd.f32 %v1435, 1.0
          %v1519 = vadd.f32 %v1437, 1.0
          %v1520 = vadd.f32 %v1439, 1.0
          %v1521 = vadd.f32 %v1441, 1.0
          %v1522 = vadd.f32 %v1443, 1.0
          %v1523 = vadd.f32 %v1445, 1.0
          %v1524 = vadd.f32 %v1447, 1.0
          %v1525 = vadd.f32 %v1449, 1.0
          %v1526 = vadd.f32 %v1451, 1.0
          %v1527 = vadd.f32 %v1453, 1.0
          %v1528 = vadd.f32 %v1455, 1.0
          %v1529 = vadd.f32 %v1457, 1.0
          %v1530 = vadd.f32 %v1459, 1.0
          %v1531 = vadd.f32 %v1461, 1.0
          %v1532 = vadd.f32 %v1463, 1.0
          %v1533 = vadd.f32 %v1465, 1.0
          %v1534 = vadd.f32 %v1467, 1.0
          %v1535 = vadd.f32 %v1469, 1.0
          %v1536 = vadd.f32 %v1471, 1.0
          %v1537 = vadd.f32 %v1473, 1.0
          %v1538 = vrcp.pop %v1474
          %v1539 = vmul.f32 1.0, %v1538
          %v1540 = vrcp.pop %v1475
          %v1541 = vmul.f32 1.0, %v1540
          %v1542 = vrcp.pop %v1476
          %v1543 = vmul.f32 1.0, %v1542
          %v1544 = vrcp.pop %v1477
          %v1545 = vmul.f32 1.0, %v1544
          %v1546 = vrcp.pop %v1478
          %v1547 = vmul.f32 1.0, %v1546
          %v1548 = vrcp.pop %v1479
          %v1549 = vmul.f32 1.0, %v1548
          %v1550 = vrcp.pop %v1480
          %v1551 = vmul.f32 1.0, %v1550
          %v1552 = vrcp.pop %v1481
          %v1553 = vmul.f32 1.0, %v1552
          %v1554 = vrcp.pop %v1482
          %v1555 = vmul.f32 1.0, %v1554
          %v1556 = vrcp.pop %v1483
          %v1557 = vmul.f32 1.0, %v1556
          %v1558 = vrcp.pop %v1484
          %v1559 = vmul.f32 1.0, %v1558
          %v1560 = vrcp.pop %v1485
          %v1561 = vmul.f32 1.0, %v1560
          %v1562 = vrcp.pop %v1486
          %v1563 = vmul.f32 1.0, %v1562
          %v1564 = vrcp.pop %v1487
          %v1565 = vmul.f32 1.0, %v1564
          %v1566 = vrcp.pop %v1488
          %v1567 = vmul.f32 1.0, %v1566
          %v1568 = vrcp.pop %v1489
          %v1569 = vmul.f32 1.0, %v1568
          %v1570 = vrcp.pop %v1490
          %v1571 = vmul.f32 1.0, %v1570
          %v1572 = vrcp.pop %v1491
          %v1573 = vmul.f32 1.0, %v1572
          %v1574 = vrcp.pop %v1492
          %v1575 = vmul.f32 1.0, %v1574
          %v1576 = vrcp.pop %v1493
          %v1577 = vmul.f32 1.0, %v1576
          %v1578 = vrcp.pop %v1494
          %v1579 = vmul.f32 1.0, %v1578
          %v1580 = vrcp.pop %v1495
          %v1581 = vmul.f32 1.0, %v1580
          %v1582 = vrcp.pop %v1496
          %v1583 = vmul.f32 1.0, %v1582
          %v1584 = vrcp.pop %v1497
          %v1585 = vmul.f32 1.0, %v1584
          %v1586 = vrcp.pop %v1498
          %v1587 = vmul.f32 1.0, %v1586
          %v1588 = vrcp.pop %v1499
          %v1589 = vmul.f32 1.0, %v1588
          %v1590 = vrcp.pop %v1500
          %v1591 = vmul.f32 1.0, %v1590
          %v1592 = vrcp.pop %v1501
          %v1593 = vmul.f32 1.0, %v1592
          %v1594 = vrcp.pop %v1502
          %v1595 = vmul.f32 1.0, %v1594
          %v1596 = vrcp.pop %v1503
          %v1597 = vmul.f32 1.0, %v1596
          %v1598 = vrcp.pop %v1504
          %v1599 = vmul.f32 1.0, %v1598
          %v1600 = vrcp.pop %v1505
          %v1601 = vmul.f32 1.0, %v1600
          %v1602 = vrcp.pop %v1506
          %v1603 = vmul.f32 1.0, %v1602
          %v1604 = vrcp.pop %v1507
          %v1605 = vmul.f32 1.0, %v1604
          %v1606 = vrcp.pop %v1508
          %v1607 = vmul.f32 1.0, %v1606
          %v1608 = vrcp.pop %v1509
          %v1609 = vmul.f32 1.0, %v1608
          %v1610 = vrcp.pop %v1510
          %v1611 = vmul.f32 1.0, %v1610
          %v1612 = vrcp.pop %v1511
          %v1613 = vmul.f32 1.0, %v1612
          %v1614 = vrcp.pop %v1512
          %v1615 = vmul.f32 1.0, %v1614
          %v1616 = vrcp.pop %v1513
          %v1617 = vmul.f32 1.0, %v1616
          %v1618 = vrcp.pop %v1514
          %v1619 = vmul.f32 1.0, %v1618
          %v1620 = vrcp.pop %v1515
          %v1621 = vmul.f32 1.0, %v1620
          %v1622 = vrcp.pop %v1516
          %v1623 = vmul.f32 1.0, %v1622
          %v1624 = vrcp.pop %v1517
          %v1625 = vmul.f32 1.0, %v1624
          %v1626 = vrcp.pop %v1518
          %v1627 = vmul.f32 1.0, %v1626
          %v1628 = vrcp.pop %v1519
          %v1629 = vmul.f32 1.0, %v1628
          %v1630 = vrcp.pop %v1520
          %v1631 = vmul.f32 1.0, %v1630
          %v1632 = vrcp.pop %v1521
          %v1633 = vmul.f32 1.0, %v1632
          %v1634 = vrcp.pop %v1522
          %v1635 = vmul.f32 1.0, %v1634
          %v1636 = vrcp.pop %v1523
          %v1637 = vmul.f32 1.0, %v1636
          %v1638 = vrcp.pop %v1524
          %v1639 = vmul.f32 1.0, %v1638
          %v1640 = vrcp.pop %v1525
          %v1641 = vmul.f32 1.0, %v1640
          %v1642 = vrcp.pop %v1526
          %v1643 = vmul.f32 1.0, %v1642
          %v1644 = vrcp.pop %v1527
          %v1645 = vmul.f32 1.0, %v1644
          %v1646 = vrcp.pop %v1528
          %v1647 = vmul.f32 1.0, %v1646
          %v1648 = vrcp.pop %v1529
          %v1649 = vmul.f32 1.0, %v1648
          %v1650 = vrcp.pop %v1530
          %v1651 = vmul.f32 1.0, %v1650
          %v1652 = vrcp.pop %v1531
          %v1653 = vmul.f32 1.0, %v1652
          %v1654 = vrcp.pop %v1532
          %v1655 = vmul.f32 1.0, %v1654
          %v1656 = vrcp.pop %v1533
          %v1657 = vmul.f32 1.0, %v1656
          %v1658 = vrcp.pop %v1534
          %v1659 = vmul.f32 1.0, %v1658
          %v1660 = vrcp.pop %v1535
          %v1661 = vmul.f32 1.0, %v1660
          %v1662 = vrcp.pop %v1536
          %v1663 = vmul.f32 1.0, %v1662
          %v1664 = vrcp.pop %v1537
          %v1665 = vmul.f32 1.0, %v1664
          %v1666 = vmul.f32 %v1218, %v1539
          %v1667 = vmul.f32 %v1219, %v1541
          %v1668 = vmul.f32 %v1220, %v1543
          %v1669 = vmul.f32 %v1221, %v1545
          %v1670 = vmul.f32 %v1222, %v1547
          %v1671 = vmul.f32 %v1223, %v1549
          %v1672 = vmul.f32 %v1224, %v1551
          %v1673 = vmul.f32 %v1225, %v1553
          %v1674 = vmul.f32 %v1226, %v1555
          %v1675 = vmul.f32 %v1227, %v1557
          %v1676 = vmul.f32 %v1228, %v1559
          %v1677 = vmul.f32 %v1229, %v1561
          %v1678 = vmul.f32 %v1230, %v1563
          %v1679 = vmul.f32 %v1231, %v1565
          %v1680 = vmul.f32 %v1232, %v1567
          %v1681 = vmul.f32 %v1233, %v1569
          %v1682 = vmul.f32 %v1234, %v1571
          %v1683 = vmul.f32 %v1235, %v1573
          %v1684 = vmul.f32 %v1236, %v1575
          %v1685 = vmul.f32 %v1237, %v1577
          %v1686 = vmul.f32 %v1238, %v1579
          %v1687 = vmul.f32 %v1239, %v1581
          %v1688 = vmul.f32 %v1240, %v1583
          %v1689 = vmul.f32 %v1241, %v1585
          %v1690 = vmul.f32 %v1242, %v1587
          %v1691 = vmul.f32 %v1243, %v1589
          %v1692 = vmul.f32 %v1244, %v1591
          %v1693 = vmul.f32 %v1245, %v1593
          %v1694 = vmul.f32 %v1246, %v1595
          %v1695 = vmul.f32 %v1247, %v1597
          %v1696 = vmul.f32 %v1248, %v1599
          %v1697 = vmul.f32 %v1249, %v1601
          %v1698 = vmul.f32 %v1250, %v1603
          %v1699 = vmul.f32 %v1251, %v1605
          %v1700 = vmul.f32 %v1252, %v1607
          %v1701 = vmul.f32 %v1253, %v1609
          %v1702 = vmul.f32 %v1254, %v1611
          %v1703 = vmul.f32 %v1255, %v1613
          %v1704 = vmul.f32 %v1256, %v1615
          %v1705 = vmul.f32 %v1257, %v1617
          %v1706 = vmul.f32 %v1258, %v1619
          %v1707 = vmul.f32 %v1259, %v1621
          %v1708 = vmul.f32 %v1260, %v1623
          %v1709 = vmul.f32 %v1261, %v1625
          %v1710 = vmul.f32 %v1262, %v1627
          %v1711 = vmul.f32 %v1263, %v1629
          %v1712 = vmul.f32 %v1264, %v1631
          %v1713 = vmul.f32 %v1265, %v1633
          %v1714 = vmul.f32 %v1266, %v1635
          %v1715 = vmul.f32 %v1267, %v1637
          %v1716 = vmul.f32 %v1268, %v1639
          %v1717 = vmul.f32 %v1269, %v1641
          %v1718 = vmul.f32 %v1270, %v1643
          %v1719 = vmul.f32 %v1271, %v1645
          %v1720 = vmul.f32 %v1272, %v1647
          %v1721 = vmul.f32 %v1273, %v1649
          %v1722 = vmul.f32 %v1274, %v1651
          %v1723 = vmul.f32 %v1275, %v1653
          %v1724 = vmul.f32 %v1276, %v1655
          %v1725 = vmul.f32 %v1277, %v1657
          %v1726 = vmul.f32 %v1278, %v1659
          %v1727 = vmul.f32 %v1279, %v1661
          %v1728 = vmul.f32 %v1280, %v1663
          %v1729 = vmul.f32 %v1281, %v1665
          %v1730 = vpack.c.bf16 %v1667, %v1666
          %v1731 = vpack.c.bf16 %v1669, %v1668
          %v1732 = vpack.c.bf16 %v1671, %v1670
          %v1733 = vpack.c.bf16 %v1673, %v1672
          %v1734 = vpack.c.bf16 %v1675, %v1674
          %v1735 = vpack.c.bf16 %v1677, %v1676
          %v1736 = vpack.c.bf16 %v1679, %v1678
          %v1737 = vpack.c.bf16 %v1681, %v1680
          %v1738 = vpack.c.bf16 %v1683, %v1682
          %v1739 = vpack.c.bf16 %v1685, %v1684
          %v1740 = vpack.c.bf16 %v1687, %v1686
          %v1741 = vpack.c.bf16 %v1689, %v1688
          %v1742 = vpack.c.bf16 %v1691, %v1690
          %v1743 = vpack.c.bf16 %v1693, %v1692
          %v1744 = vpack.c.bf16 %v1695, %v1694
          %v1745 = vpack.c.bf16 %v1697, %v1696
          %v1746 = vpack.c.bf16 %v1699, %v1698
          %v1747 = vpack.c.bf16 %v1701, %v1700
          %v1748 = vpack.c.bf16 %v1703, %v1702
          %v1749 = vpack.c.bf16 %v1705, %v1704
          %v1750 = vpack.c.bf16 %v1707, %v1706
          %v1751 = vpack.c.bf16 %v1709, %v1708
          %v1752 = vpack.c.bf16 %v1711, %v1710
          %v1753 = vpack.c.bf16 %v1713, %v1712
          %v1754 = vpack.c.bf16 %v1715, %v1714
          %v1755 = vpack.c.bf16 %v1717, %v1716
          %v1756 = vpack.c.bf16 %v1719, %v1718
          %v1757 = vpack.c.bf16 %v1721, %v1720
          %v1758 = vpack.c.bf16 %v1723, %v1722
          %v1759 = vpack.c.bf16 %v1725, %v1724
          %v1760 = vpack.c.bf16 %v1727, %v1726
          %v1761 = vpack.c.bf16 %v1729, %v1728
          %v1794 = vunpack.c.l.b16 %v1730
          %v1795 = vunpack.c.h.b16 %v1730
          %v1796 = vunpack.c.l.b16 %v1731
          %v1797 = vunpack.c.h.b16 %v1731
          %v1798 = vunpack.c.l.b16 %v1732
          %v1799 = vunpack.c.h.b16 %v1732
          %v1800 = vunpack.c.l.b16 %v1733
          %v1801 = vunpack.c.h.b16 %v1733
          %v1802 = vunpack.c.l.b16 %v1734
          %v1803 = vunpack.c.h.b16 %v1734
          %v1804 = vunpack.c.l.b16 %v1735
          %v1805 = vunpack.c.h.b16 %v1735
          %v1806 = vunpack.c.l.b16 %v1736
          %v1807 = vunpack.c.h.b16 %v1736
          %v1808 = vunpack.c.l.b16 %v1737
          %v1809 = vunpack.c.h.b16 %v1737
          %v1810 = vunpack.c.l.b16 %v1738
          %v1811 = vunpack.c.h.b16 %v1738
          %v1812 = vunpack.c.l.b16 %v1739
          %v1813 = vunpack.c.h.b16 %v1739
          %v1814 = vunpack.c.l.b16 %v1740
          %v1815 = vunpack.c.h.b16 %v1740
          %v1816 = vunpack.c.l.b16 %v1741
          %v1817 = vunpack.c.h.b16 %v1741
          %v1818 = vunpack.c.l.b16 %v1742
          %v1819 = vunpack.c.h.b16 %v1742
          %v1820 = vunpack.c.l.b16 %v1743
          %v1821 = vunpack.c.h.b16 %v1743
          %v1822 = vunpack.c.l.b16 %v1744
          %v1823 = vunpack.c.h.b16 %v1744
          %v1824 = vunpack.c.l.b16 %v1745
          %v1825 = vunpack.c.h.b16 %v1745
          %v1826 = vunpack.c.l.b16 %v1746
          %v1827 = vunpack.c.h.b16 %v1746
          %v1828 = vunpack.c.l.b16 %v1747
          %v1829 = vunpack.c.h.b16 %v1747
          %v1830 = vunpack.c.l.b16 %v1748
          %v1831 = vunpack.c.h.b16 %v1748
          %v1832 = vunpack.c.l.b16 %v1749
          %v1833 = vunpack.c.h.b16 %v1749
          %v1834 = vunpack.c.l.b16 %v1750
          %v1835 = vunpack.c.h.b16 %v1750
          %v1836 = vunpack.c.l.b16 %v1751
          %v1837 = vunpack.c.h.b16 %v1751
          %v1838 = vunpack.c.l.b16 %v1752
          %v1839 = vunpack.c.h.b16 %v1752
          %v1840 = vunpack.c.l.b16 %v1753
          %v1841 = vunpack.c.h.b16 %v1753
          %v1842 = vunpack.c.l.b16 %v1754
          %v1843 = vunpack.c.h.b16 %v1754
          %v1844 = vunpack.c.l.b16 %v1755
          %v1845 = vunpack.c.h.b16 %v1755
          %v1846 = vunpack.c.l.b16 %v1756
          %v1847 = vunpack.c.h.b16 %v1756
          %v1848 = vunpack.c.l.b16 %v1757
          %v1849 = vunpack.c.h.b16 %v1757
          %v1850 = vunpack.c.l.b16 %v1758
          %v1851 = vunpack.c.h.b16 %v1758
          %v1852 = vunpack.c.l.b16 %v1759
          %v1853 = vunpack.c.h.b16 %v1759
          %v1854 = vunpack.c.l.b16 %v1760
          %v1855 = vunpack.c.h.b16 %v1760
          %v1856 = vunpack.c.l.b16 %v1761
          %v1857 = vunpack.c.h.b16 %v1761
          %v1858 = vpack.c.b16 %v1794, %v1794
          %v1859 = vpack.c.b16 %v1795, %v1795
          %v1860 = vpack.c.b16 %v1796, %v1796
          %v1861 = vpack.c.b16 %v1797, %v1797
          %v1862 = vpack.c.b16 %v1798, %v1798
          %v1863 = vpack.c.b16 %v1799, %v1799
          %v1864 = vpack.c.b16 %v1800, %v1800
          %v1865 = vpack.c.b16 %v1801, %v1801
          %v1866 = vpack.c.b16 %v1802, %v1802
          %v1867 = vpack.c.b16 %v1803, %v1803
          %v1868 = vpack.c.b16 %v1804, %v1804
          %v1869 = vpack.c.b16 %v1805, %v1805
          %v1870 = vpack.c.b16 %v1806, %v1806
          %v1871 = vpack.c.b16 %v1807, %v1807
          %v1872 = vpack.c.b16 %v1808, %v1808
          %v1873 = vpack.c.b16 %v1809, %v1809
          %v1874 = vpack.c.b16 %v1810, %v1810
          %v1875 = vpack.c.b16 %v1811, %v1811
          %v1876 = vpack.c.b16 %v1812, %v1812
          %v1877 = vpack.c.b16 %v1813, %v1813
          %v1878 = vpack.c.b16 %v1814, %v1814
          %v1879 = vpack.c.b16 %v1815, %v1815
          %v1880 = vpack.c.b16 %v1816, %v1816
          %v1881 = vpack.c.b16 %v1817, %v1817
          %v1882 = vpack.c.b16 %v1818, %v1818
          %v1883 = vpack.c.b16 %v1819, %v1819
          %v1884 = vpack.c.b16 %v1820, %v1820
          %v1885 = vpack.c.b16 %v1821, %v1821
          %v1886 = vpack.c.b16 %v1822, %v1822
          %v1887 = vpack.c.b16 %v1823, %v1823
          %v1888 = vpack.c.b16 %v1824, %v1824
          %v1889 = vpack.c.b16 %v1825, %v1825
          %v1890 = vpack.c.b16 %v1826, %v1826
          %v1891 = vpack.c.b16 %v1827, %v1827
          %v1892 = vpack.c.b16 %v1828, %v1828
          %v1893 = vpack.c.b16 %v1829, %v1829
          %v1894 = vpack.c.b16 %v1830, %v1830
          %v1895 = vpack.c.b16 %v1831, %v1831
          %v1896 = vpack.c.b16 %v1832, %v1832
          %v1897 = vpack.c.b16 %v1833, %v1833
          %v1898 = vpack.c.b16 %v1834, %v1834
          %v1899 = vpack.c.b16 %v1835, %v1835
          %v1900 = vpack.c.b16 %v1836, %v1836
          %v1901 = vpack.c.b16 %v1837, %v1837
          %v1902 = vpack.c.b16 %v1838, %v1838
          %v1903 = vpack.c.b16 %v1839, %v1839
          %v1904 = vpack.c.b16 %v1840, %v1840
          %v1905 = vpack.c.b16 %v1841, %v1841
          %v1906 = vpack.c.b16 %v1842, %v1842
          %v1907 = vpack.c.b16 %v1843, %v1843
          %v1908 = vpack.c.b16 %v1844, %v1844
          %v1909 = vpack.c.b16 %v1845, %v1845
          %v1910 = vpack.c.b16 %v1846, %v1846
          %v1911 = vpack.c.b16 %v1847, %v1847
          %v1912 = vpack.c.b16 %v1848, %v1848
          %v1913 = vpack.c.b16 %v1849, %v1849
          %v1914 = vpack.c.b16 %v1850, %v1850
          %v1915 = vpack.c.b16 %v1851, %v1851
          %v1916 = vpack.c.b16 %v1852, %v1852
          %v1917 = vpack.c.b16 %v1853, %v1853
          %v1918 = vpack.c.b16 %v1854, %v1854
          %v1919 = vpack.c.b16 %v1855, %v1855
          %v1920 = vpack.c.b16 %v1856, %v1856
          %v1921 = vpack.c.b16 %v1857, %v1857
          %1986 = vst [vmem:[%s228] sm:$0xf] %v1858
          %1987 = vst [vmem:[%s228 + $0x4] sm:$0xf] %v1859
          %1988 = vst [vmem:[%s228 + $0x8] sm:$0xf] %v1860
          %1989 = vst [vmem:[%s228 + $0xc] sm:$0xf] %v1861
          %1990 = vst [vmem:[%s228 + $0x10] sm:$0xf] %v1862
          %1991 = vst [vmem:[%s228 + $0x14] sm:$0xf] %v1863
          %1992 = vst [vmem:[%s228 + $0x18] sm:$0xf] %v1864
          %1993 = vst [vmem:[%s228 + $0x1c] sm:$0xf] %v1865
          %1994 = vst [vmem:[%s228 + $0x20] sm:$0xf] %v1866
          %1995 = vst [vmem:[%s228 + $0x24] sm:$0xf] %v1867
          %1996 = vst [vmem:[%s228 + $0x28] sm:$0xf] %v1868
          %1997 = vst [vmem:[%s228 + $0x2c] sm:$0xf] %v1869
          %1998 = vst [vmem:[%s228 + $0x30] sm:$0xf] %v1870
          %1999 = vst [vmem:[%s228 + $0x34] sm:$0xf] %v1871
          %2000 = vst [vmem:[%s228 + $0x38] sm:$0xf] %v1872
          %2001 = vst [vmem:[%s228 + $0x3c] sm:$0xf] %v1873
          %2002 = vst [vmem:[%s228 + $0x40] sm:$0xf] %v1874
          %2003 = vst [vmem:[%s228 + $0x44] sm:$0xf] %v1875
          %2004 = vst [vmem:[%s228 + $0x48] sm:$0xf] %v1876
          %2005 = vst [vmem:[%s228 + $0x4c] sm:$0xf] %v1877
          %2006 = vst [vmem:[%s228 + $0x50] sm:$0xf] %v1878
          %2007 = vst [vmem:[%s228 + $0x54] sm:$0xf] %v1879
          %2008 = vst [vmem:[%s228 + $0x58] sm:$0xf] %v1880
          %2009 = vst [vmem:[%s228 + $0x5c] sm:$0xf] %v1881
          %2010 = vst [vmem:[%s228 + $0x60] sm:$0xf] %v1882
          %2011 = vst [vmem:[%s228 + $0x64] sm:$0xf] %v1883
          %2012 = vst [vmem:[%s228 + $0x68] sm:$0xf] %v1884
          %2013 = vst [vmem:[%s228 + $0x6c] sm:$0xf] %v1885
          %2014 = vst [vmem:[%s228 + $0x70] sm:$0xf] %v1886
          %2015 = vst [vmem:[%s228 + $0x74] sm:$0xf] %v1887
          %2016 = vst [vmem:[%s228 + $0x78] sm:$0xf] %v1888
          %2017 = vst [vmem:[%s228 + $0x7c] sm:$0xf] %v1889
          %2018 = vst [vmem:[%s228 + $0x80] sm:$0xf] %v1890
          %2019 = vst [vmem:[%s228 + $0x84] sm:$0xf] %v1891
          %2020 = vst [vmem:[%s228 + $0x88] sm:$0xf] %v1892
          %2021 = vst [vmem:[%s228 + $0x8c] sm:$0xf] %v1893
          %2022 = vst [vmem:[%s228 + $0x90] sm:$0xf] %v1894
          %2023 = vst [vmem:[%s228 + $0x94] sm:$0xf] %v1895
          %2024 = vst [vmem:[%s228 + $0x98] sm:$0xf] %v1896
          %2025 = vst [vmem:[%s228 + $0x9c] sm:$0xf] %v1897
          %2026 = vst [vmem:[%s228 + $0xa0] sm:$0xf] %v1898
          %2027 = vst [vmem:[%s228 + $0xa4] sm:$0xf] %v1899
          %2028 = vst [vmem:[%s228 + $0xa8] sm:$0xf] %v1900
          %2029 = vst [vmem:[%s228 + $0xac] sm:$0xf] %v1901
          %2030 = vst [vmem:[%s228 + $0xb0] sm:$0xf] %v1902
          %2031 = vst [vmem:[%s228 + $0xb4] sm:$0xf] %v1903
          %2032 = vst [vmem:[%s228 + $0xb8] sm:$0xf] %v1904
          %2033 = vst [vmem:[%s228 + $0xbc] sm:$0xf] %v1905
          %2034 = vst [vmem:[%s228 + $0xc0] sm:$0xf] %v1906
          %2035 = vst [vmem:[%s228 + $0xc4] sm:$0xf] %v1907
          %2036 = vst [vmem:[%s228 + $0xc8] sm:$0xf] %v1908
          %2037 = vst [vmem:[%s228 + $0xcc] sm:$0xf] %v1909
          %2038 = vst [vmem:[%s228 + $0xd0] sm:$0xf] %v1910
          %2039 = vst [vmem:[%s228 + $0xd4] sm:$0xf] %v1911
          %2040 = vst [vmem:[%s228 + $0xd8] sm:$0xf] %v1912
          %2041 = vst [vmem:[%s228 + $0xdc] sm:$0xf] %v1913
          %2042 = vst [vmem:[%s228 + $0xe0] sm:$0xf] %v1914
          %2043 = vst [vmem:[%s228 + $0xe4] sm:$0xf] %v1915
          %2044 = vst [vmem:[%s228 + $0xe8] sm:$0xf] %v1916
          %2045 = vst [vmem:[%s228 + $0xec] sm:$0xf] %v1917
          %2046 = vst [vmem:[%s228 + $0xf0] sm:$0xf] %v1918
          %2047 = vst [vmem:[%s228 + $0xf4] sm:$0xf] %v1919
          %2048 = vst [vmem:[%s228 + $0xf8] sm:$0xf] %v1920
          %2049 = vst [vmem:[%s228 + $0xfc] sm:$0xf] %v1921
        $region40: #{matmul_bias_act.1} parent=31 // pred_fallthru
          _
        %s2050 = sand.u32 %s128, 1
        %s2051 = scalar_lea.sflag [#allocation4], %s2050
        %s2052 = sand.u32 %s128, 1
        %s2053 = smul.addr %s2052, 256
        %s2054 = scalar_lea.vmem [#allocation3], %s2053
        // Predicated region
        $region41: #{matmul_bias_act.1} parent=31 // pred_check
          %p2055 = pneg %p138
        $region42: #{matmul_bias_act.1} parent=31 // pred_check_branch
          %2057 = sbr.rel (%p2055) target = $region44
        $region43: #{matmul_bias_act.1} parent=31 // pred_region
          %s2058 = smul.u32 64, %s22
          %s2060 = ssub.s32 4096, 4096
          %2061 = vsyncadd %s2051, %s2060
          %s2062 = sadd.s32 %s23, %s2058
          %s2063 = smul.addr %s2062, 64
          %s2064 = scalar_lea.hbm %s3, %s2063
          %s2065 = sshll.u32 %s2054, 4
          %s2066 = int_to_ptr.vmem [resolvable:$true] %s2065
          %2071 = dma.vmem_to_hbm [thread:$0]  %s2066, 4096, %s2064, %s2051, 64, 64, 4
        $region44: #{matmul_bias_act.1} parent=31 // pred_fallthru
          _
      $region32: #{matmul_bias_act.1} parent=5 // pred_fallthru
        _
      %p2072 = scmp.le.s32.totalorder 2, %s12
      // Predicated region
      $region45: #{matmul_bias_act.1} parent=5 // pred_check
        %p2073 = pneg %p2072
      $region46: #{matmul_bias_act.1} parent=5 // pred_check_branch
        %2075 = sbr.rel (%p2073) target = $region48
      $region47: #{matmul_bias_act.1} parent=5 // pred_region
        %s2076 = ssub.s32 %s12, 2
        // Predicated region
        $region49: #{matmul_bias_act.1} parent=47 // pred_check
          %p2077 = pneg %p144
        $region50: #{matmul_bias_act.1} parent=47 // pred_check_branch
          %2079 = sbr.rel (%p2077) target = $region52
        $region51: #{matmul_bias_act.1} parent=47 // pred_region
          %s2080 = sand.u32 %s129, 1
          %s2081 = scalar_lea.sflag [#allocation4], %s2080
          %s2082 = sand.u32 %s129, 1
          %s2083 = smul.addr %s2082, 256
          %s2084 = scalar_lea.vmem [#allocation3], %s2083
          %2085 = dma.done %s2081, 4096
        $region52: #{matmul_bias_act.1} parent=47 // pred_fallthru
          _
      $region48: #{matmul_bias_act.1} parent=5 // pred_fallthru
        _
    $region6: #{matmul_bias_act.1} parent=1 // loop_footer
      %s16 = sadd.s32 1, %s12
    $region7: #{matmul_bias_act.1} parent=1 // loop_footer_branch
      %11 = sbr.rel target = $region3
    $region8: #{matmul_bias_act.1} parent=1 // loop_exit
      _
    %2086 = vsyncpa [#allocation4], 1
    %s2087 = scalar_lea.sflag [#allocation4], 1
    %2088 = vsyncpa %s2087, 1

</llo_original>
